<compile_context>
chip_gen: v6e
topology: v6e:2x2x1
jax: 0.10.0
libtpu: 0.0.40
codegen_flags: <defaults>
</compile_context>

<pallas_src>
import functools
import numpy as np
import jax
import jax.numpy as jnp
from jax import lax
from jax.experimental import pallas as pl
from jax.experimental.pallas import tpu as pltpu

BITS = 4
MAXQ = (1 << BITS) - 1
PACK = 32 // BITS  # features per int32


# ----------------------------- Pallas kernels -----------------------------

def _fused_gate_up_kernel(x_ref, qg_ref, sg_ref, bg_ref,
                          qu_ref, su_ref, bu_ref,
                          out_ref, acc_g, acc_u, *, gs, gpt):
    """c = silu(x @ Wg) * (x @ Wu), K-tiled; Wg/Wu dequantized in-kernel.

    q*_ref: (tk, tn) int8 codes; s*_ref/b*_ref: (gpt, tn) f32 per-group scale /
    fused offset (-(zero+1)*scale). Dequant in f32, dot in bf16, acc in f32.
    """
    @pl.when(pl.program_id(2) == 0)
    def _():
        acc_g[...] = jnp.zeros_like(acc_g)
        acc_u[...] = jnp.zeros_like(acc_u)

    x = x_ref[...]                       # (tm, tk) bf16
    qg = qg_ref[...]                     # (tk, tn) int8
    qu = qu_ref[...]
    sg, bg = sg_ref[...], bg_ref[...]    # (gpt, tn) f32
    su, bu = su_ref[...], bu_ref[...]

    for g in range(gpt):                 # static unroll, gpt is small
        lo, hi = g * gs, (g + 1) * gs
        xg = x[:, lo:hi]                                            # (tm, gs) bf16
        wg = (qg[lo:hi, :].astype(jnp.float32) * sg[g:g + 1, :]
              + bg[g:g + 1, :]).astype(jnp.bfloat16)                # (gs, tn)
        wu = (qu[lo:hi, :].astype(jnp.float32) * su[g:g + 1, :]
              + bu[g:g + 1, :]).astype(jnp.bfloat16)
        acc_g[...] += jnp.dot(xg, wg, preferred_element_type=jnp.float32)
        acc_u[...] += jnp.dot(xg, wu, preferred_element_type=jnp.float32)

    @pl.when(pl.program_id(2) == pl.num_programs(2) - 1)
    def _():
        gacc = acc_g[...]
        out_ref[...] = (gacc * jax.nn.sigmoid(gacc) * acc_u[...]).astype(out_ref.dtype)


def _quant_matmul_kernel(x_ref, qw_ref, s_ref, b_ref, out_ref, acc, *, gs, gpt):
    """y = x @ W with W dequantized in-kernel (down projection)."""
    @pl.when(pl.program_id(2) == 0)
    def _():
        acc[...] = jnp.zeros_like(acc)

    x = x_ref[...]
    q = qw_ref[...]
    s, b = s_ref[...], b_ref[...]

    for g in range(gpt):
        lo, hi = g * gs, (g + 1) * gs
        w = (q[lo:hi, :].astype(jnp.float32) * s[g:g + 1, :]
             + b[g:g + 1, :]).astype(jnp.bfloat16)
        acc[...] += jnp.dot(x[:, lo:hi], w, preferred_element_type=jnp.float32)

    @pl.when(pl.program_id(2) == pl.num_programs(2) - 1)
    def _():
        out_ref[...] = acc[...].astype(out_ref.dtype)


# ------------------------------ pallas_call wrappers ------------------------------

def _check_tiles(M, K, N, gs, tm, tn, tk):
    assert M % tm == 0 and N % tn == 0 and K % tk == 0
    assert tk % gs == 0
    gpt = tk // gs
    G = K // gs
    # (gpt, tn) block of the per-group tables must either cover all groups or be
    # a multiple of the (8, 128) sublane tiling.
    assert gpt == G or gpt % 8 == 0
    return gpt


def fused_gate_up(x, qg, sg, bg, qu, su, bu, *, gs, tm, tn, tk):
    M, K = x.shape
    N = qg.shape[1]
    gpt = _check_tiles(M, K, N, gs, tm, tn, tk)
    grid = (M // tm, N // tn, K // tk)

    q_spec = pl.BlockSpec((tk, tn), lambda i, j, k: (k, j))
    g_spec = pl.BlockSpec((gpt, tn), lambda i, j, k: (k, j))
    kernel = functools.partial(_fused_gate_up_kernel, gs=gs, gpt=gpt)

    return pl.pallas_call(
        kernel,
        out_shape=jax.ShapeDtypeStruct((M, N), jnp.bfloat16),
        grid_spec=pltpu.PrefetchScalarGridSpec(
            num_scalar_prefetch=0,
            grid=grid,
            in_specs=[pl.BlockSpec((tm, tk), lambda i, j, k: (i, k)),
                      q_spec, g_spec, g_spec,     # gate: q, scale, offset
                      q_spec, g_spec, g_spec],    # up:   q, scale, offset
            out_specs=pl.BlockSpec((tm, tn), lambda i, j, k: (i, j)),
            scratch_shapes=[pltpu.VMEM((tm, tn), jnp.float32),
                            pltpu.VMEM((tm, tn), jnp.float32)],
        ),
        compiler_params=pltpu.CompilerParams(
            dimension_semantics=("parallel", "parallel", "arbitrary")),
    )(x, qg, sg, bg, qu, su, bu)


def quant_matmul(x, qw, s, b, *, gs, tm, tn, tk):
    M, K = x.shape
    N = qw.shape[1]
    gpt = _check_tiles(M, K, N, gs, tm, tn, tk)
    grid = (M // tm, N // tn, K // tk)

    q_spec = pl.BlockSpec((tk, tn), lambda i, j, k: (k, j))
    g_spec = pl.BlockSpec((gpt, tn), lambda i, j, k: (k, j))
    kernel = functools.partial(_quant_matmul_kernel, gs=gs, gpt=gpt)

    return pl.pallas_call(
        kernel,
        out_shape=jax.ShapeDtypeStruct((M, N), jnp.bfloat16),
        grid_spec=pltpu.PrefetchScalarGridSpec(
            num_scalar_prefetch=0,
            grid=grid,
            in_specs=[pl.BlockSpec((tm, tk), lambda i, j, k: (i, k)),
                      q_spec, g_spec, g_spec],
            out_specs=pl.BlockSpec((tm, tn), lambda i, j, k: (i, j)),
            scratch_shapes=[pltpu.VMEM((tm, tn), jnp.float32)],
        ),
        compiler_params=pltpu.CompilerParams(
            dimension_semantics=("parallel", "parallel", "arbitrary")),
    )(x, qw, s, b)


# ------------------------------ tile selection ------------------------------

def _round_up(x, m):
    return (x + m - 1) // m * m


def _pick_tm(M):
    return min(256, _round_up(M, 8))


def _pick_tn(N):
    for t in (512, 256, 128):
        if N >= t and N % t == 0:
            return t
    return N


def _pick_tk(K, gs):
    assert K % gs == 0
    if K <= 1024:
        return K                      # whole reduction per step; gpt == G
    if K % (8 * gs) == 0:
        return 8 * gs                 # 8 groups per tile (sublane aligned)
    return K


# ------------------------------ GPTQ packing glue ------------------------------

def pack_rows(w_int):
    """(K, N) int in [0, 2^BITS) -> (K//PACK, N) int32, packed along K."""
    K, N = w_int.shape
    w = w_int.astype(jnp.uint32).reshape(K // PACK, PACK, N)
    parts = [w[:, i, :] << jnp.uint32(i * BITS) for i in range(PACK)]
    packed = functools.reduce(jnp.bitwise_or, parts)
    return lax.bitcast_convert_type(packed, jnp.int32)


def pack_cols(z_int):
    """(G, N) int in [0, 2^BITS) -> (G, N//PACK) int32, packed along N."""
    G, N = z_int.shape
    z = z_int.astype(jnp.uint32).reshape(G, N // PACK, PACK)
    parts = [z[:, :, i] << jnp.uint32(i * BITS) for i in range(PACK)]
    packed = functools.reduce(jnp.bitwise_or, parts)
    return lax.bitcast_convert_type(packed, jnp.int32)


def unpack_rows(qweight, K):
    """(K//PACK, N) int32 -> (K, N) int32 of values in [0, MAXQ]."""
    shifts = (jnp.arange(PACK, dtype=jnp.int32) * BITS)[None, :, None]
    w = (qweight[:, None, :] >> shifts) & MAXQ
    return w.reshape(K, qweight.shape[1])


def unpack_cols(qzeros, N):
    """(G, N//PACK) int32 -> (G, N) int32 of values in [0, MAXQ]."""
    shifts = (jnp.arange(PACK, dtype=jnp.int32) * BITS)[None, None, :]
    z = (qzeros[:, :, None] >> shifts) & MAXQ
    return z.reshape(qzeros.shape[0], N)


def make_quant_linear(key, in_features, out_features, group_size):
    """Deterministically build GPTQ-style QuantLinear params (no checkpoint load)."""
    k1, k2, k3 = jax.random.split(key, 3)
    G = in_features // group_size
    w_int = jax.random.randint(k1, (in_features, out_features), 0, MAXQ + 1, dtype=jnp.int32)
    z_int = jax.random.randint(k2, (G, out_features), 0, MAXQ + 1, dtype=jnp.int32)
    scales = jax.random.uniform(k3, (G, out_features), jnp.float32, 0.01, 0.03).astype(jnp.float16)
    g_idx = (jnp.arange(in_features, dtype=jnp.int32) // group_size)
    return {
        "qweight": pack_rows(w_int),            # (K//PACK, N) int32
        "qzeros": pack_cols(z_int),             # (G, N//PACK) int32
        "scales": scales,                       # (G, N) float16
        "g_idx": g_idx,                         # (K,) int32
        "bias": None,                           # optional (N,) bias
        "infeatures": in_features,
        "outfeatures": out_features,
    }


def prep_quant_params(p):
    """Setup glue (runs once): int8 codes + per-group f32 scale / fused offset."""
    K, N = p["infeatures"], p["outfeatures"]
    G = p["scales"].shape[0]
    gs = K // G
    g_idx = np.asarray(p["g_idx"])
    if not np.array_equal(g_idx, np.arange(K) // gs):
        # TODO(synk): act_order (shuffled g_idx) needs a K-permutation of x and of
        # the unpacked codes; not implemented here.
        raise NotImplementedError("only contiguous g_idx (no act_order) is supported")
    q = unpack_rows(p["qweight"], K).astype(jnp.int8)       # (K, N), values 0..15
    z = unpack_cols(p["qzeros"], N).astype(jnp.float32)     # (G, N)
    s = p["scales"].astype(jnp.float32)                     # (G, N)
    b = -(z + 1.0) * s                                      # fused offset
    return q, s, b, gs


def dequant_reference(p):
    """Dense f32 dequant, for the pure-JAX reference only."""
    K, N = p["infeatures"], p["outfeatures"]
    q = unpack_rows(p["qweight"], K).astype(jnp.float32)
    z = unpack_cols(p["qzeros"], N).astype(jnp.float32)[p["g_idx"]]
    s = p["scales"].astype(jnp.float32)[p["g_idx"]]
    return (q - (z + 1.0)) * s


# ------------------------------ Fused module ------------------------------

class FusedLlamaMLPQuantizedPallas:
    def __init__(self, gate_proj, down_proj, up_proj):
        self.infeatures = gate_proj["infeatures"]
        self.intermediate_size = gate_proj["outfeatures"]
        self.outfeatures = down_proj["outfeatures"]
        self.bits = BITS
        self.maxq = MAXQ
        qg, sg, bg, gs_g = prep_quant_params(gate_proj)
        qu, su, bu, gs_u = prep_quant_params(up_proj)
        qd, sd, bd, gs_d = prep_quant_params(down_proj)
        assert gs_g == gs_u
        self.gate, self.up, self.down = (qg, sg, bg), (qu, su, bu), (qd, sd, bd)
        self.gs_gateup, self.gs_down = gs_g, gs_d
        self.down_bias = down_proj.get("bias", None)
        # NOTE: gate/up biases (if any) are ignored, matching the Triton fused kernel.

    def __call__(self, x):
        # x: (..., infeatures) float16
        out_lead = x.shape[:-1]
        M = int(np.prod(out_lead)) if out_lead else 1
        K, N, O = self.infeatures, self.intermediate_size, self.outfeatures

        xb = x.reshape(M, K).astype(jnp.bfloat16)
        tm = _pick_tm(M)
        Mp = _round_up(M, tm)
        if Mp != M:                                   # handle arbitrary batch*seq
            xb = jnp.pad(xb, ((0, Mp - M), (0, 0)))

        qg, sg, bg = self.gate
        qu, su, bu = self.up
        c = fused_gate_up(xb, qg, sg, bg, qu, su, bu, gs=self.gs_gateup,
                          tm=tm, tn=_pick_tn(N), tk=_pick_tk(K, self.gs_gateup))

        qd, sd, bd = self.down
        y = quant_matmul(c, qd, sd, bd, gs=self.gs_down,
                         tm=tm, tn=_pick_tn(O), tk=_pick_tk(N, self.gs_down))
        if self.down_bias is not None:
            y = y + self.down_bias.astype(y.dtype)
        y = y[:M].astype(jnp.float16)
        return y.reshape(out_lead + (O,))


# ------------------------------ main ------------------------------

if __name__ == "__main__":
    key = jax.random.PRNGKey(0)
    k_gate, k_up, k_down, k_x = jax.random.split(key, 4)

    batch, seq = 2, 8
    infeatures, intermediate, outfeatures = 256, 512, 256
    group_size = 128

    gate_proj = make_quant_linear(k_gate, infeatures, intermediate, group_size)
    up_proj = make_quant_linear(k_up, infeatures, intermediate, group_size)
    down_proj = make_quant_linear(k_down, intermediate, outfeatures, group_size)

    mlp = FusedLlamaMLPQuantizedPallas(gate_proj, down_proj, up_proj)

    x = jax.random.normal(k_x, (batch, seq, infeatures), dtype=jnp.float32).astype(jnp.float16)

    y = mlp(x)
    y = jax.block_until_ready(y)
    assert y.shape == (batch, seq, outfeatures) and y.dtype == jnp.float16

    # Pure-JAX reference with the same operand precision as the kernel
    # (bf16 dequantized weights, bf16 activations, f32 accumulation, bf16 c).
    Wg = dequant_reference(gate_proj).astype(jnp.bfloat16)
    Wu = dequant_reference(up_proj).astype(jnp.bfloat16)
    Wd = dequant_reference(down_proj).astype(jnp.bfloat16)
    xr = x.reshape(-1, infeatures).astype(jnp.bfloat16)
    g = jnp.dot(xr, Wg, preferred_element_type=jnp.float32)
    u = jnp.dot(xr, Wu, preferred_element_type=jnp.float32)
    c_ref = (g * jax.nn.sigmoid(g) * u).astype(jnp.bfloat16)
    y_ref = jnp.dot(c_ref, Wd, preferred_element_type=jnp.float32).astype(jnp.float16)
    y_ref = y_ref.reshape(batch, seq, outfeatures)

    np.testing.assert_allclose(np.asarray(y, np.float32),
                               np.asarray(y_ref, np.float32),
                               rtol=2e-2, atol=2e-2)
    print("KERNEL_OK")
</pallas_src>

<mosaic_0001>
module attributes {stable_mosaic.version = 11 : i64} {
  func.func @_fused_gate_up_kernel(%arg0: i32, %arg1: i32, %arg2: i32, %arg3: memref<16x256xbf16, #tpu.memory_space<vmem>>, %arg4: memref<256x512xi8, #tpu.memory_space<vmem>>, %arg5: memref<2x512xf32, #tpu.memory_space<vmem>>, %arg6: memref<2x512xf32, #tpu.memory_space<vmem>>, %arg7: memref<256x512xi8, #tpu.memory_space<vmem>>, %arg8: memref<2x512xf32, #tpu.memory_space<vmem>>, %arg9: memref<2x512xf32, #tpu.memory_space<vmem>>, %arg10: memref<16x512xbf16, #tpu.memory_space<vmem>>, %arg11: memref<16x512xf32, #tpu.memory_space<vmem>>, %arg12: memref<16x512xf32, #tpu.memory_space<vmem>>) attributes {dimension_semantics = [#tpu.dimension_semantics<parallel>, #tpu.dimension_semantics<parallel>, #tpu.dimension_semantics<arbitrary>], iteration_bounds = array<i64: 1, 1, 1>, scalar_prefetch = 0 : i64, scratch_operands = 2 : i64, tpu.core_type = #tpu.core_type<tc>, window_params = [{transform_indices = @transform_0, window_bounds = array<i64: 16, 256>}, {transform_indices = @transform_1, window_bounds = array<i64: 256, 512>}, {transform_indices = @transform_2, window_bounds = array<i64: 2, 512>}, {transform_indices = @transform_3, window_bounds = array<i64: 2, 512>}, {transform_indices = @transform_4, window_bounds = array<i64: 256, 512>}, {transform_indices = @transform_5, window_bounds = array<i64: 2, 512>}, {transform_indices = @transform_6, window_bounds = array<i64: 2, 512>}, {transform_indices = @transform_7, window_bounds = array<i64: 16, 512>}]} {
    %c0_i32 = arith.constant 0 : i32
    %0 = arith.cmpi eq, %arg2, %c0_i32 : i32
    %1 = arith.extui %0 : i1 to i32
    %c0_i32_0 = arith.constant 0 : i32
    %2 = arith.cmpi ne, %1, %c0_i32_0 : i32
    scf.if %2 {
      %cst_35 = arith.constant 0.000000e+00 : f32
      %67 = vector.broadcast %cst_35 : f32 to vector<16x512xf32>
      %c0_36 = arith.constant 0 : index
      %c0_37 = arith.constant 0 : index
      %68 = vector.load %arg11[%c0_36, %c0_37] : memref<16x512xf32, #tpu.memory_space<vmem>>, vector<16x512xf32>
      tpu.vector_store %arg11[%c0_36, %c0_37], %67 {strides = array<i32>} : memref<16x512xf32, #tpu.memory_space<vmem>>, vector<16x512xf32>,
      %cst_38 = arith.constant 0.000000e+00 : f32
      %69 = vector.broadcast %cst_38 : f32 to vector<16x512xf32>
      %c0_39 = arith.constant 0 : index
      %c0_40 = arith.constant 0 : index
      %70 = vector.load %arg12[%c0_39, %c0_40] : memref<16x512xf32, #tpu.memory_space<vmem>>, vector<16x512xf32>
      tpu.vector_store %arg12[%c0_39, %c0_40], %69 {strides = array<i32>} : memref<16x512xf32, #tpu.memory_space<vmem>>, vector<16x512xf32>,
    } else {
    }
    %c0 = arith.constant 0 : index
    %c0_1 = arith.constant 0 : index
    %3 = vector.load %arg3[%c0, %c0_1] : memref<16x256xbf16, #tpu.memory_space<vmem>>, vector<16x256xbf16>
    %c0_2 = arith.constant 0 : index
    %c0_3 = arith.constant 0 : index
    %4 = vector.load %arg4[%c0_2, %c0_3] : memref<256x512xi8, #tpu.memory_space<vmem>>, vector<256x512xi8>
    %c0_4 = arith.constant 0 : index
    %c0_5 = arith.constant 0 : index
    %5 = vector.load %arg7[%c0_4, %c0_5] : memref<256x512xi8, #tpu.memory_space<vmem>>, vector<256x512xi8>
    %c0_6 = arith.constant 0 : index
    %c0_7 = arith.constant 0 : index
    %6 = vector.load %arg5[%c0_6, %c0_7] : memref<2x512xf32, #tpu.memory_space<vmem>>, vector<2x512xf32>
    %c0_8 = arith.constant 0 : index
    %c0_9 = arith.constant 0 : index
    %7 = vector.load %arg6[%c0_8, %c0_9] : memref<2x512xf32, #tpu.memory_space<vmem>>, vector<2x512xf32>
    %c0_10 = arith.constant 0 : index
    %c0_11 = arith.constant 0 : index
    %8 = vector.load %arg8[%c0_10, %c0_11] : memref<2x512xf32, #tpu.memory_space<vmem>>, vector<2x512xf32>
    %c0_12 = arith.constant 0 : index
    %c0_13 = arith.constant 0 : index
    %9 = vector.load %arg9[%c0_12, %c0_13] : memref<2x512xf32, #tpu.memory_space<vmem>>, vector<2x512xf32>
    %10 = vector.extract_strided_slice %3 {offsets = [0, 0], sizes = [16, 128], strides = [1, 1]} : vector<16x256xbf16> to vector<16x128xbf16>
    %11 = vector.extract_strided_slice %4 {offsets = [0, 0], sizes = [128, 512], strides = [1, 1]} : vector<256x512xi8> to vector<128x512xi8>
    %12 = arith.sitofp %11 : vector<128x512xi8> to vector<128x512xf32>
    %13 = vector.extract_strided_slice %6 {offsets = [0, 0], sizes = [1, 512], strides = [1, 1]} : vector<2x512xf32> to vector<1x512xf32>
    %14 = vector.broadcast %13 : vector<1x512xf32> to vector<128x512xf32>
    %15 = arith.mulf %12, %14 : vector<128x512xf32>
    %16 = vector.extract_strided_slice %7 {offsets = [0, 0], sizes = [1, 512], strides = [1, 1]} : vector<2x512xf32> to vector<1x512xf32>
    %17 = vector.broadcast %16 : vector<1x512xf32> to vector<128x512xf32>
    %18 = arith.addf %15, %17 : vector<128x512xf32>
    %19 = arith.truncf %18 : vector<128x512xf32> to vector<128x512xbf16>
    %20 = vector.extract_strided_slice %5 {offsets = [0, 0], sizes = [128, 512], strides = [1, 1]} : vector<256x512xi8> to vector<128x512xi8>
    %21 = arith.sitofp %20 : vector<128x512xi8> to vector<128x512xf32>
    %22 = vector.extract_strided_slice %8 {offsets = [0, 0], sizes = [1, 512], strides = [1, 1]} : vector<2x512xf32> to vector<1x512xf32>
    %23 = vector.broadcast %22 : vector<1x512xf32> to vector<128x512xf32>
    %24 = arith.mulf %21, %23 : vector<128x512xf32>
    %25 = vector.extract_strided_slice %9 {offsets = [0, 0], sizes = [1, 512], strides = [1, 1]} : vector<2x512xf32> to vector<1x512xf32>
    %26 = vector.broadcast %25 : vector<1x512xf32> to vector<128x512xf32>
    %27 = arith.addf %24, %26 : vector<128x512xf32>
    %28 = arith.truncf %27 : vector<128x512xf32> to vector<128x512xbf16>
    %c0_14 = arith.constant 0 : index
    %c0_15 = arith.constant 0 : index
    %29 = vector.load %arg11[%c0_14, %c0_15] : memref<16x512xf32, #tpu.memory_space<vmem>>, vector<16x512xf32>
    %cst = arith.constant dense<0.000000e+00> : vector<16x512xf32>
    %30 = tpu.matmul %10, %19, %cst {dimension_numbers = #tpu.dot_dimension_numbers<[1], [0], [0], [1], [0, 0, 1, 1], [], []>} : vector<16x128xbf16>, vector<128x512xbf16>, vector<16x512xf32> -> vector<16x512xf32>
    %31 = arith.addf %29, %30 : vector<16x512xf32>
    %c0_16 = arith.constant 0 : index
    %c0_17 = arith.constant 0 : index
    %32 = vector.load %arg11[%c0_16, %c0_17] : memref<16x512xf32, #tpu.memory_space<vmem>>, vector<16x512xf32>
    tpu.vector_store %arg11[%c0_16, %c0_17], %31 {strides = array<i32>} : memref<16x512xf32, #tpu.memory_space<vmem>>, vector<16x512xf32>,
    %c0_18 = arith.constant 0 : index
    %c0_19 = arith.constant 0 : index
    %33 = vector.load %arg12[%c0_18, %c0_19] : memref<16x512xf32, #tpu.memory_space<vmem>>, vector<16x512xf32>
    %cst_20 = arith.constant dense<0.000000e+00> : vector<16x512xf32>
    %34 = tpu.matmul %10, %28, %cst_20 {dimension_numbers = #tpu.dot_dimension_numbers<[1], [0], [0], [1], [0, 0, 1, 1], [], []>} : vector<16x128xbf16>, vector<128x512xbf16>, vector<16x512xf32> -> vector<16x512xf32>
    %35 = arith.addf %33, %34 : vector<16x512xf32>
    %c0_21 = arith.constant 0 : index
    %c0_22 = arith.constant 0 : index
    %36 = vector.load %arg12[%c0_21, %c0_22] : memref<16x512xf32, #tpu.memory_space<vmem>>, vector<16x512xf32>
    tpu.vector_store %arg12[%c0_21, %c0_22], %35 {strides = array<i32>} : memref<16x512xf32, #tpu.memory_space<vmem>>, vector<16x512xf32>,
    %37 = vector.extract_strided_slice %3 {offsets = [0, 128], sizes = [16, 128], strides = [1, 1]} : vector<16x256xbf16> to vector<16x128xbf16>
    %38 = vector.extract_strided_slice %4 {offsets = [128, 0], sizes = [128, 512], strides = [1, 1]} : vector<256x512xi8> to vector<128x512xi8>
    %39 = arith.sitofp %38 : vector<128x512xi8> to vector<128x512xf32>
    %40 = vector.extract_strided_slice %6 {offsets = [1, 0], sizes = [1, 512], strides = [1, 1]} : vector<2x512xf32> to vector<1x512xf32>
    %41 = vector.broadcast %40 : vector<1x512xf32> to vector<128x512xf32>
    %42 = arith.mulf %39, %41 : vector<128x512xf32>
    %43 = vector.extract_strided_slice %7 {offsets = [1, 0], sizes = [1, 512], strides = [1, 1]} : vector<2x512xf32> to vector<1x512xf32>
    %44 = vector.broadcast %43 : vector<1x512xf32> to vector<128x512xf32>
    %45 = arith.addf %42, %44 : vector<128x512xf32>
    %46 = arith.truncf %45 : vector<128x512xf32> to vector<128x512xbf16>
    %47 = vector.extract_strided_slice %5 {offsets = [128, 0], sizes = [128, 512], strides = [1, 1]} : vector<256x512xi8> to vector<128x512xi8>
    %48 = arith.sitofp %47 : vector<128x512xi8> to vector<128x512xf32>
    %49 = vector.extract_strided_slice %8 {offsets = [1, 0], sizes = [1, 512], strides = [1, 1]} : vector<2x512xf32> to vector<1x512xf32>
    %50 = vector.broadcast %49 : vector<1x512xf32> to vector<128x512xf32>
    %51 = arith.mulf %48, %50 : vector<128x512xf32>
    %52 = vector.extract_strided_slice %9 {offsets = [1, 0], sizes = [1, 512], strides = [1, 1]} : vector<2x512xf32> to vector<1x512xf32>
    %53 = vector.broadcast %52 : vector<1x512xf32> to vector<128x512xf32>
    %54 = arith.addf %51, %53 : vector<128x512xf32>
    %55 = arith.truncf %54 : vector<128x512xf32> to vector<128x512xbf16>
    %c0_23 = arith.constant 0 : index
    %c0_24 = arith.constant 0 : index
    %56 = vector.load %arg11[%c0_23, %c0_24] : memref<16x512xf32, #tpu.memory_space<vmem>>, vector<16x512xf32>
    %cst_25 = arith.constant dense<0.000000e+00> : vector<16x512xf32>
    %57 = tpu.matmul %37, %46, %cst_25 {dimension_numbers = #tpu.dot_dimension_numbers<[1], [0], [0], [1], [0, 0, 1, 1], [], []>} : vector<16x128xbf16>, vector<128x512xbf16>, vector<16x512xf32> -> vector<16x512xf32>
    %58 = arith.addf %56, %57 : vector<16x512xf32>
    %c0_26 = arith.constant 0 : index
    %c0_27 = arith.constant 0 : index
    %59 = vector.load %arg11[%c0_26, %c0_27] : memref<16x512xf32, #tpu.memory_space<vmem>>, vector<16x512xf32>
    tpu.vector_store %arg11[%c0_26, %c0_27], %58 {strides = array<i32>} : memref<16x512xf32, #tpu.memory_space<vmem>>, vector<16x512xf32>,
    %c0_28 = arith.constant 0 : index
    %c0_29 = arith.constant 0 : index
    %60 = vector.load %arg12[%c0_28, %c0_29] : memref<16x512xf32, #tpu.memory_space<vmem>>, vector<16x512xf32>
    %cst_30 = arith.constant dense<0.000000e+00> : vector<16x512xf32>
    %61 = tpu.matmul %37, %55, %cst_30 {dimension_numbers = #tpu.dot_dimension_numbers<[1], [0], [0], [1], [0, 0, 1, 1], [], []>} : vector<16x128xbf16>, vector<128x512xbf16>, vector<16x512xf32> -> vector<16x512xf32>
    %62 = arith.addf %60, %61 : vector<16x512xf32>
    %c0_31 = arith.constant 0 : index
    %c0_32 = arith.constant 0 : index
    %63 = vector.load %arg12[%c0_31, %c0_32] : memref<16x512xf32, #tpu.memory_space<vmem>>, vector<16x512xf32>
    tpu.vector_store %arg12[%c0_31, %c0_32], %62 {strides = array<i32>} : memref<16x512xf32, #tpu.memory_space<vmem>>, vector<16x512xf32>,
    %c0_i32_33 = arith.constant 0 : i32
    %64 = arith.cmpi eq, %arg2, %c0_i32_33 : i32
    %65 = arith.extui %64 : i1 to i32
    %c0_i32_34 = arith.constant 0 : i32
    %66 = arith.cmpi ne, %65, %c0_i32_34 : i32
    scf.if %66 {
      %c0_35 = arith.constant 0 : index
      %c0_36 = arith.constant 0 : index
      %67 = vector.load %arg11[%c0_35, %c0_36] : memref<16x512xf32, #tpu.memory_space<vmem>>, vector<16x512xf32>
      %68 = arith.negf %67 : vector<16x512xf32>
      %69 = math.exp %68 : vector<16x512xf32>
      %cst_37 = arith.constant 1.000000e+00 : f32
      %70 = vector.broadcast %cst_37 : f32 to vector<16x512xf32>
      %71 = arith.addf %70, %69 : vector<16x512xf32>
      %72 = arith.divf %70, %71 : vector<16x512xf32>
      %73 = arith.mulf %67, %72 : vector<16x512xf32>
      %c0_38 = arith.constant 0 : index
      %c0_39 = arith.constant 0 : index
      %74 = vector.load %arg12[%c0_38, %c0_39] : memref<16x512xf32, #tpu.memory_space<vmem>>, vector<16x512xf32>
      %75 = arith.mulf %73, %74 : vector<16x512xf32>
      %76 = arith.truncf %75 : vector<16x512xf32> to vector<16x512xbf16>
      %c0_40 = arith.constant 0 : index
      %c0_41 = arith.constant 0 : index
      %77 = vector.load %arg10[%c0_40, %c0_41] : memref<16x512xbf16, #tpu.memory_space<vmem>>, vector<16x512xbf16>
      tpu.vector_store %arg10[%c0_40, %c0_41], %76 {strides = array<i32>} : memref<16x512xbf16, #tpu.memory_space<vmem>>, vector<16x512xbf16>,
    } else {
    }
    return
  }
  func.func @transform_0(%arg0: i32, %arg1: i32, %arg2: i32) -> (i32, i32) {
    %c0_i32 = arith.constant 0 : i32
    return %arg0, %arg2 : i32, i32
  }
  func.func @transform_1(%arg0: i32, %arg1: i32, %arg2: i32) -> (i32, i32) {
    %c0_i32 = arith.constant 0 : i32
    return %arg2, %arg1 : i32, i32
  }
  func.func @transform_2(%arg0: i32, %arg1: i32, %arg2: i32) -> (i32, i32) {
    %c0_i32 = arith.constant 0 : i32
    return %arg2, %arg1 : i32, i32
  }
  func.func @transform_3(%arg0: i32, %arg1: i32, %arg2: i32) -> (i32, i32) {
    %c0_i32 = arith.constant 0 : i32
    return %arg2, %arg1 : i32, i32
  }
  func.func @transform_4(%arg0: i32, %arg1: i32, %arg2: i32) -> (i32, i32) {
    %c0_i32 = arith.constant 0 : i32
    return %arg2, %arg1 : i32, i32
  }
  func.func @transform_5(%arg0: i32, %arg1: i32, %arg2: i32) -> (i32, i32) {
    %c0_i32 = arith.constant 0 : i32
    return %arg2, %arg1 : i32, i32
  }
  func.func @transform_6(%arg0: i32, %arg1: i32, %arg2: i32) -> (i32, i32) {
    %c0_i32 = arith.constant 0 : i32
    return %arg2, %arg1 : i32, i32
  }
  func.func @transform_7(%arg0: i32, %arg1: i32, %arg2: i32) -> (i32, i32) {
    %c0_i32 = arith.constant 0 : i32
    return %arg0, %arg1 : i32, i32
  }
}

</mosaic_0001>

<llo_original>
// kernel: tpu_custom_call.1
$region0: #{tpu_custom_call.1}
  #allocation0 [shape = 'u32[]', space=smem, size = 0x4, offset = 0x4, fixed_abs, tag = 'smem constant byte address 0x4 - core index']
  #allocation1 [shape = 'u32[144,128]{1,0:T(1,128)}', space=vmem, size = 0x12000, scoped, tag = 'internal scratch']
  #allocation2 [shape = 'f32[16,512]{1,0:T(8,128)}', space=vmem, size = 0x8000, scoped, tag = 'scratch operand']
  #allocation3 [shape = 'f32[16,512]{1,0:T(8,128)}', space=vmem, size = 0x8000, scoped, tag = 'scratch operand']
  %s0 = inlined_call_operand.hbm [shape: bf16[16,256], index: 0, kind: input, shape index: {}]
  %s1 = inlined_call_operand.hbm [shape: s8[256,512], index: 1, kind: input, shape index: {}]
  %s2 = inlined_call_operand.hbm [shape: f32[2,512], index: 2, kind: input, shape index: {}]
  %s3 = inlined_call_operand.hbm [shape: f32[2,512], index: 3, kind: input, shape index: {}]
  %s4 = inlined_call_operand.hbm [shape: s8[256,512], index: 4, kind: input, shape index: {}]
  %s5 = inlined_call_operand.vmem [shape: f32[2,512], index: 5, kind: input, shape index: {}]
  %s6 = inlined_call_operand.hbm [shape: f32[2,512], index: 6, kind: input, shape index: {}]
  %s7 = inlined_call_operand.hbm [shape: bf16[16,512], index: 7, kind: output, shape index: {}]
  %s8 = sld [smem:[#allocation0]]
  $region70: #{tpu_custom_call.1} parent=0
    _
  %s10 = ssub.s32 1, %s8
  %s11 = scalar_select 0, %s10, %s8
  $region1: #{tpu_custom_call.1} parent=0
    #allocation4 [shape = 'u8[8192]{0}', space=vmem, size = 0x2000, scoped, tag = 'input window, operand 0, single buffered']
    #allocation5 [shape = 's32[1]{0}', space=sflag, size = 0x4, scoped, tag = 'scoped memory for tpu_custom_call.1']
    #allocation6 [shape = 's32[1]{0}', space=sflag, size = 0x4, scoped, tag = 'scoped memory for tpu_custom_call.1']
    #allocation7 [shape = 'u8[131072]{0}', space=vmem, size = 0x20000, scoped, tag = 'input window, operand 1, single buffered']
    #allocation8 [shape = 's32[1]{0}', space=sflag, size = 0x4, scoped, tag = 'scoped memory for tpu_custom_call.1']
    #allocation9 [shape = 'u8[4096]{0}', space=vmem, size = 0x1000, scoped, tag = 'input window, operand 2, single buffered']
    #allocation10 [shape = 'u8[4096]{0}', space=vmem, size = 0x1000, scoped, tag = 'input window, operand 3, single buffered']
    #allocation11 [shape = 's32[1]{0}', space=sflag, size = 0x4, scoped, tag = 'scoped memory for tpu_custom_call.1']
    #allocation12 [shape = 'u8[131072]{0}', space=vmem, size = 0x20000, scoped, tag = 'input window, operand 4, single buffered']
    #allocation13 [shape = 'u8[4096]{0}', space=vmem, size = 0x1000, scoped, tag = 'input window, operand 6, single buffered']
    #allocation14 [shape = 's32[1]{0}', space=sflag, size = 0x4, scoped, tag = 'scoped memory for tpu_custom_call.1']
    #allocation15 [shape = 'u8[16384]{0}', space=vmem, size = 0x4000, scoped, tag = 'output window, operand 0, single buffered']
    %12 = vsyncpa [#allocation5], 0
    %13 = vsyncpa [#allocation8], 0
    %14 = vsyncpa [#allocation11], 0
    %15 = vsyncpa [#allocation14], 0
    %16 = vsyncpa [#allocation6], 0
    // Predicated region
    $region2: #{tpu_custom_call.1} parent=1 // pred_check
      _
    $region3: #{tpu_custom_call.1} parent=1 // pred_check_branch
      %18 = sbr.rel (0) target = $region5
    $region4: #{tpu_custom_call.1} parent=1 // pred_region
      %s20 = ssub.s32 256, 256
      %21 = vsyncadd [#allocation5], %s20
      %s22 = sshll.u32 [#allocation4], 4
      %s23 = int_to_ptr.vmem [resolvable:$true] %s22
      %28 = dma.hbm_to_vmem [thread:$0]  %s0, 256, %s23, [#allocation5], 128, 128, 8
    $region5: #{tpu_custom_call.1} parent=1 // pred_fallthru
      _
    // Predicated region
    $region6: #{tpu_custom_call.1} parent=1 // pred_check
      _
    $region7: #{tpu_custom_call.1} parent=1 // pred_check_branch
      %30 = sbr.rel (0) target = $region9
    $region8: #{tpu_custom_call.1} parent=1 // pred_region
      %s32 = ssub.s32 4096, 4096
      %33 = vsyncadd [#allocation8], %s32
      %s34 = sshll.u32 [#allocation7], 4
      %s35 = int_to_ptr.vmem [resolvable:$true] %s34
      %40 = dma.hbm_to_vmem [thread:$0]  %s1, 4096, %s35, [#allocation8], 512, 512, 32
    $region9: #{tpu_custom_call.1} parent=1 // pred_fallthru
      _
    // Predicated region
    $region10: #{tpu_custom_call.1} parent=1 // pred_check
      _
    $region11: #{tpu_custom_call.1} parent=1 // pred_check_branch
      %42 = sbr.rel (0) target = $region13
    $region12: #{tpu_custom_call.1} parent=1 // pred_region
      %s44 = ssub.s32 128, 128
      %45 = vsyncadd [#allocation8], %s44
      %s47 = sshll.u32 [#allocation9], 4
      %s48 = int_to_ptr.vmem [resolvable:$true] %s47
      %50 = dma.hbm_to_vmem [thread:$0]  %s2, 128, %s48, [#allocation8]
    $region13: #{tpu_custom_call.1} parent=1 // pred_fallthru
      _
    // Predicated region
    $region14: #{tpu_custom_call.1} parent=1 // pred_check
      _
    $region15: #{tpu_custom_call.1} parent=1 // pred_check_branch
      %52 = sbr.rel (0) target = $region17
    $region16: #{tpu_custom_call.1} parent=1 // pred_region
      %s54 = ssub.s32 128, 128
      %55 = vsyncadd [#allocation11], %s54
      %s57 = sshll.u32 [#allocation10], 4
      %s58 = int_to_ptr.vmem [resolvable:$true] %s57
      %60 = dma.hbm_to_vmem [thread:$0]  %s3, 128, %s58, [#allocation11]
    $region17: #{tpu_custom_call.1} parent=1 // pred_fallthru
      _
    // Predicated region
    $region18: #{tpu_custom_call.1} parent=1 // pred_check
      _
    $region19: #{tpu_custom_call.1} parent=1 // pred_check_branch
      %62 = sbr.rel (0) target = $region21
    $region20: #{tpu_custom_call.1} parent=1 // pred_region
      %s64 = ssub.s32 4096, 4096
      %65 = vsyncadd [#allocation11], %s64
      %s66 = sshll.u32 [#allocation12], 4
      %s67 = int_to_ptr.vmem [resolvable:$true] %s66
      %72 = dma.hbm_to_vmem [thread:$0]  %s4, 4096, %s67, [#allocation11], 512, 512, 32
    $region21: #{tpu_custom_call.1} parent=1 // pred_fallthru
      _
    // Predicated region
    $region22: #{tpu_custom_call.1} parent=1 // pred_check
      _
    $region23: #{tpu_custom_call.1} parent=1 // pred_check_branch
      %74 = sbr.rel (0) target = $region25
    $region24: #{tpu_custom_call.1} parent=1 // pred_region
      _
    $region25: #{tpu_custom_call.1} parent=1 // pred_fallthru
      _
    // Predicated region
    $region26: #{tpu_custom_call.1} parent=1 // pred_check
      _
    $region27: #{tpu_custom_call.1} parent=1 // pred_check_branch
      %76 = sbr.rel (0) target = $region29
    $region28: #{tpu_custom_call.1} parent=1 // pred_region
      %s78 = ssub.s32 128, 128
      %79 = vsyncadd [#allocation14], %s78
      %s81 = sshll.u32 [#allocation13], 4
      %s82 = int_to_ptr.vmem [resolvable:$true] %s81
      %84 = dma.hbm_to_vmem [thread:$0]  %s6, 128, %s82, [#allocation14]
    $region29: #{tpu_custom_call.1} parent=1 // pred_fallthru
      _
    // Predicated region
    $region30: #{tpu_custom_call.1} parent=1 // pred_check
      _
    $region31: #{tpu_custom_call.1} parent=1 // pred_check_branch
      %86 = sbr.rel (0) target = $region33
    $region32: #{tpu_custom_call.1} parent=1 // pred_region
      %87 = dma.done [#allocation5], 256
    $region33: #{tpu_custom_call.1} parent=1 // pred_fallthru
      _
    // Predicated region
    $region34: #{tpu_custom_call.1} parent=1 // pred_check
      _
    $region35: #{tpu_custom_call.1} parent=1 // pred_check_branch
      %89 = sbr.rel (0) target = $region37
    $region36: #{tpu_custom_call.1} parent=1 // pred_region
      %90 = dma.done [#allocation8], 4096
    $region37: #{tpu_custom_call.1} parent=1 // pred_fallthru
      _
    // Predicated region
    $region38: #{tpu_custom_call.1} parent=1 // pred_check
      _
    $region39: #{tpu_custom_call.1} parent=1 // pred_check_branch
      %92 = sbr.rel (0) target = $region41
    $region40: #{tpu_custom_call.1} parent=1 // pred_region
      %93 = dma.done [#allocation8], 128
    $region41: #{tpu_custom_call.1} parent=1 // pred_fallthru
      _
    // Predicated region
    $region42: #{tpu_custom_call.1} parent=1 // pred_check
      _
    $region43: #{tpu_custom_call.1} parent=1 // pred_check_branch
      %95 = sbr.rel (0) target = $region45
    $region44: #{tpu_custom_call.1} parent=1 // pred_region
      %96 = dma.done [#allocation11], 128
    $region45: #{tpu_custom_call.1} parent=1 // pred_fallthru
      _
    // Predicated region
    $region46: #{tpu_custom_call.1} parent=1 // pred_check
      _
    $region47: #{tpu_custom_call.1} parent=1 // pred_check_branch
      %98 = sbr.rel (0) target = $region49
    $region48: #{tpu_custom_call.1} parent=1 // pred_region
      %99 = dma.done [#allocation11], 4096
    $region49: #{tpu_custom_call.1} parent=1 // pred_fallthru
      _
    // Predicated region
    $region50: #{tpu_custom_call.1} parent=1 // pred_check
      _
    $region51: #{tpu_custom_call.1} parent=1 // pred_check_branch
      %101 = sbr.rel (0) target = $region53
    $region52: #{tpu_custom_call.1} parent=1 // pred_region
      %102 = dma.done [#allocation14], 128
    $region53: #{tpu_custom_call.1} parent=1 // pred_fallthru
      _
    %p104 = scmp.eq.s32.totalorder 0, 0
    // Predicated region
    $region54: #{tpu_custom_call.1} parent=1 // pred_check
      %p105 = pneg %p104
    $region55: #{tpu_custom_call.1} parent=1 // pred_check_branch
      %107 = sbr.rel (%p105) target = $region57
    $region56: #{tpu_custom_call.1} parent=1 // pred_region
      %108 = vst [vmem:[#allocation2] sm:$0xff] 0.0
      %109 = vst [vmem:[#allocation2 + $0x8] sm:$0xff] 0.0
      %110 = vst [vmem:[#allocation2 + $0x10] sm:$0xff] 0.0
      %111 = vst [vmem:[#allocation2 + $0x18] sm:$0xff] 0.0
      %112 = vst [vmem:[#allocation2 + $0x20] sm:$0xff] 0.0
      %113 = vst [vmem:[#allocation2 + $0x28] sm:$0xff] 0.0
      %114 = vst [vmem:[#allocation2 + $0x30] sm:$0xff] 0.0
      %115 = vst [vmem:[#allocation2 + $0x38] sm:$0xff] 0.0
      %116 = vst [vmem:[#allocation3] sm:$0xff] 0.0
      %117 = vst [vmem:[#allocation3 + $0x8] sm:$0xff] 0.0
      %118 = vst [vmem:[#allocation3 + $0x10] sm:$0xff] 0.0
      %119 = vst [vmem:[#allocation3 + $0x18] sm:$0xff] 0.0
      %120 = vst [vmem:[#allocation3 + $0x20] sm:$0xff] 0.0
      %121 = vst [vmem:[#allocation3 + $0x28] sm:$0xff] 0.0
      %122 = vst [vmem:[#allocation3 + $0x30] sm:$0xff] 0.0
      %123 = vst [vmem:[#allocation3 + $0x38] sm:$0xff] 0.0
    $region57: #{tpu_custom_call.1} parent=1 // pred_fallthru
      _
    %v124 = vld [vmem:[#allocation4] sm:$0xff]
    %v125 = vld [vmem:[#allocation4 + $0x8] sm:$0xff]
    %v126 = vld [vmem:[#allocation7] sm:$0xff]
    %v127 = vld [vmem:[#allocation7 + $0x8] sm:$0xff]
    %v128 = vld [vmem:[#allocation7 + $0x10] sm:$0xff]
    %v129 = vld [vmem:[#allocation7 + $0x18] sm:$0xff]
    %v130 = vld [vmem:[#allocation7 + $0x20] sm:$0xff]
    %v131 = vld [vmem:[#allocation7 + $0x28] sm:$0xff]
    %v132 = vld [vmem:[#allocation7 + $0x30] sm:$0xff]
    %v133 = vld [vmem:[#allocation7 + $0x38] sm:$0xff]
    %v134 = vld [vmem:[#allocation7 + $0x40] sm:$0xff]
    %v135 = vld [vmem:[#allocation7 + $0x48] sm:$0xff]
    %v136 = vld [vmem:[#allocation7 + $0x50] sm:$0xff]
    %v137 = vld [vmem:[#allocation7 + $0x58] sm:$0xff]
    %v138 = vld [vmem:[#allocation7 + $0x60] sm:$0xff]
    %v139 = vld [vmem:[#allocation7 + $0x68] sm:$0xff]
    %v140 = vld [vmem:[#allocation7 + $0x70] sm:$0xff]
    %v141 = vld [vmem:[#allocation7 + $0x78] sm:$0xff]
    %v142 = vld [vmem:[#allocation7 + $0x80] sm:$0xff]
    %v143 = vld [vmem:[#allocation7 + $0x88] sm:$0xff]
    %v144 = vld [vmem:[#allocation7 + $0x90] sm:$0xff]
    %v145 = vld [vmem:[#allocation7 + $0x98] sm:$0xff]
    %v146 = vld [vmem:[#allocation7 + $0xa0] sm:$0xff]
    %v147 = vld [vmem:[#allocation7 + $0xa8] sm:$0xff]
    %v148 = vld [vmem:[#allocation7 + $0xb0] sm:$0xff]
    %v149 = vld [vmem:[#allocation7 + $0xb8] sm:$0xff]
    %v150 = vld [vmem:[#allocation7 + $0xc0] sm:$0xff]
    %v151 = vld [vmem:[#allocation7 + $0xc8] sm:$0xff]
    %v152 = vld [vmem:[#allocation7 + $0xd0] sm:$0xff]
    %v153 = vld [vmem:[#allocation7 + $0xd8] sm:$0xff]
    %v154 = vld [vmem:[#allocation7 + $0xe0] sm:$0xff]
    %v155 = vld [vmem:[#allocation7 + $0xe8] sm:$0xff]
    %v156 = vld [vmem:[#allocation7 + $0xf0] sm:$0xff]
    %v157 = vld [vmem:[#allocation7 + $0xf8] sm:$0xff]
    %v158 = vld [vmem:[#allocation12] sm:$0xff]
    %v159 = vld [vmem:[#allocation12 + $0x8] sm:$0xff]
    %v160 = vld [vmem:[#allocation12 + $0x10] sm:$0xff]
    %v161 = vld [vmem:[#allocation12 + $0x18] sm:$0xff]
    %v162 = vld [vmem:[#allocation12 + $0x20] sm:$0xff]
    %v163 = vld [vmem:[#allocation12 + $0x28] sm:$0xff]
    %v164 = vld [vmem:[#allocation12 + $0x30] sm:$0xff]
    %v165 = vld [vmem:[#allocation12 + $0x38] sm:$0xff]
    %v166 = vld [vmem:[#allocation12 + $0x40] sm:$0xff]
    %v167 = vld [vmem:[#allocation12 + $0x48] sm:$0xff]
    %v168 = vld [vmem:[#allocation12 + $0x50] sm:$0xff]
    %v169 = vld [vmem:[#allocation12 + $0x58] sm:$0xff]
    %v170 = vld [vmem:[#allocation12 + $0x60] sm:$0xff]
    %v171 = vld [vmem:[#allocation12 + $0x68] sm:$0xff]
    %v172 = vld [vmem:[#allocation12 + $0x70] sm:$0xff]
    %v173 = vld [vmem:[#allocation12 + $0x78] sm:$0xff]
    %v174 = vld [vmem:[#allocation12 + $0x80] sm:$0xff]
    %v175 = vld [vmem:[#allocation12 + $0x88] sm:$0xff]
    %v176 = vld [vmem:[#allocation12 + $0x90] sm:$0xff]
    %v177 = vld [vmem:[#allocation12 + $0x98] sm:$0xff]
    %v178 = vld [vmem:[#allocation12 + $0xa0] sm:$0xff]
    %v179 = vld [vmem:[#allocation12 + $0xa8] sm:$0xff]
    %v180 = vld [vmem:[#allocation12 + $0xb0] sm:$0xff]
    %v181 = vld [vmem:[#allocation12 + $0xb8] sm:$0xff]
    %v182 = vld [vmem:[#allocation12 + $0xc0] sm:$0xff]
    %v183 = vld [vmem:[#allocation12 + $0xc8] sm:$0xff]
    %v184 = vld [vmem:[#allocation12 + $0xd0] sm:$0xff]
    %v185 = vld [vmem:[#allocation12 + $0xd8] sm:$0xff]
    %v186 = vld [vmem:[#allocation12 + $0xe0] sm:$0xff]
    %v187 = vld [vmem:[#allocation12 + $0xe8] sm:$0xff]
    %v188 = vld [vmem:[#allocation12 + $0xf0] sm:$0xff]
    %v189 = vld [vmem:[#allocation12 + $0xf8] sm:$0xff]
    %v190 = vld [vmem:[#allocation9] sm:$0xff]
    %v191 = vld [vmem:[#allocation10] sm:$0xff]
    %v192 = vld [vmem:[%s5] sm:$0xff]
    %v193 = vld [vmem:[#allocation13] sm:$0xff]
    %v194 = vunpack.c.0.s8 %v126
    %v195 = vunpack.c.0.s8 %v127
    %v196 = vunpack.c.0.s8 %v128
    %v197 = vunpack.c.0.s8 %v129
    %v198 = vunpack.c.1.s8 %v126
    %v199 = vunpack.c.1.s8 %v127
    %v200 = vunpack.c.1.s8 %v128
    %v201 = vunpack.c.1.s8 %v129
    %v202 = vunpack.c.2.s8 %v126
    %v203 = vunpack.c.2.s8 %v127
    %v204 = vunpack.c.2.s8 %v128
    %v205 = vunpack.c.2.s8 %v129
    %v206 = vunpack.c.3.s8 %v126
    %v207 = vunpack.c.3.s8 %v127
    %v208 = vunpack.c.3.s8 %v128
    %v209 = vunpack.c.3.s8 %v129
    %v210 = vunpack.c.0.s8 %v130
    %v211 = vunpack.c.0.s8 %v131
    %v212 = vunpack.c.0.s8 %v132
    %v213 = vunpack.c.0.s8 %v133
    %v214 = vunpack.c.1.s8 %v130
    %v215 = vunpack.c.1.s8 %v131
    %v216 = vunpack.c.1.s8 %v132
    %v217 = vunpack.c.1.s8 %v133
    %v218 = vunpack.c.2.s8 %v130
    %v219 = vunpack.c.2.s8 %v131
    %v220 = vunpack.c.2.s8 %v132
    %v221 = vunpack.c.2.s8 %v133
    %v222 = vunpack.c.3.s8 %v130
    %v223 = vunpack.c.3.s8 %v131
    %v224 = vunpack.c.3.s8 %v132
    %v225 = vunpack.c.3.s8 %v133
    %v226 = vunpack.c.0.s8 %v134
    %v227 = vunpack.c.0.s8 %v135
    %v228 = vunpack.c.0.s8 %v136
    %v229 = vunpack.c.0.s8 %v137
    %v230 = vunpack.c.1.s8 %v134
    %v231 = vunpack.c.1.s8 %v135
    %v232 = vunpack.c.1.s8 %v136
    %v233 = vunpack.c.1.s8 %v137
    %v234 = vunpack.c.2.s8 %v134
    %v235 = vunpack.c.2.s8 %v135
    %v236 = vunpack.c.2.s8 %v136
    %v237 = vunpack.c.2.s8 %v137
    %v238 = vunpack.c.3.s8 %v134
    %v239 = vunpack.c.3.s8 %v135
    %v240 = vunpack.c.3.s8 %v136
    %v241 = vunpack.c.3.s8 %v137
    %v242 = vunpack.c.0.s8 %v138
    %v243 = vunpack.c.0.s8 %v139
    %v244 = vunpack.c.0.s8 %v140
    %v245 = vunpack.c.0.s8 %v141
    %v246 = vunpack.c.1.s8 %v138
    %v247 = vunpack.c.1.s8 %v139
    %v248 = vunpack.c.1.s8 %v140
    %v249 = vunpack.c.1.s8 %v141
    %v250 = vunpack.c.2.s8 %v138
    %v251 = vunpack.c.2.s8 %v139
    %v252 = vunpack.c.2.s8 %v140
    %v253 = vunpack.c.2.s8 %v141
    %v254 = vunpack.c.3.s8 %v138
    %v255 = vunpack.c.3.s8 %v139
    %v256 = vunpack.c.3.s8 %v140
    %v257 = vunpack.c.3.s8 %v141
    %v258 = vcvt.s32.f32 %v194
    %v259 = vcvt.s32.f32 %v195
    %v260 = vcvt.s32.f32 %v196
    %v261 = vcvt.s32.f32 %v197
    %v262 = vcvt.s32.f32 %v198
    %v263 = vcvt.s32.f32 %v199
    %v264 = vcvt.s32.f32 %v200
    %v265 = vcvt.s32.f32 %v201
    %v266 = vcvt.s32.f32 %v202
    %v267 = vcvt.s32.f32 %v203
    %v268 = vcvt.s32.f32 %v204
    %v269 = vcvt.s32.f32 %v205
    %v270 = vcvt.s32.f32 %v206
    %v271 = vcvt.s32.f32 %v207
    %v272 = vcvt.s32.f32 %v208
    %v273 = vcvt.s32.f32 %v209
    %v274 = vcvt.s32.f32 %v210
    %v275 = vcvt.s32.f32 %v211
    %v276 = vcvt.s32.f32 %v212
    %v277 = vcvt.s32.f32 %v213
    %v278 = vcvt.s32.f32 %v214
    %v279 = vcvt.s32.f32 %v215
    %v280 = vcvt.s32.f32 %v216
    %v281 = vcvt.s32.f32 %v217
    %v282 = vcvt.s32.f32 %v218
    %v283 = vcvt.s32.f32 %v219
    %v284 = vcvt.s32.f32 %v220
    %v285 = vcvt.s32.f32 %v221
    %v286 = vcvt.s32.f32 %v222
    %v287 = vcvt.s32.f32 %v223
    %v288 = vcvt.s32.f32 %v224
    %v289 = vcvt.s32.f32 %v225
    %v290 = vcvt.s32.f32 %v226
    %v291 = vcvt.s32.f32 %v227
    %v292 = vcvt.s32.f32 %v228
    %v293 = vcvt.s32.f32 %v229
    %v294 = vcvt.s32.f32 %v230
    %v295 = vcvt.s32.f32 %v231
    %v296 = vcvt.s32.f32 %v232
    %v297 = vcvt.s32.f32 %v233
    %v298 = vcvt.s32.f32 %v234
    %v299 = vcvt.s32.f32 %v235
    %v300 = vcvt.s32.f32 %v236
    %v301 = vcvt.s32.f32 %v237
    %v302 = vcvt.s32.f32 %v238
    %v303 = vcvt.s32.f32 %v239
    %v304 = vcvt.s32.f32 %v240
    %v305 = vcvt.s32.f32 %v241
    %v306 = vcvt.s32.f32 %v242
    %v307 = vcvt.s32.f32 %v243
    %v308 = vcvt.s32.f32 %v244
    %v309 = vcvt.s32.f32 %v245
    %v310 = vcvt.s32.f32 %v246
    %v311 = vcvt.s32.f32 %v247
    %v312 = vcvt.s32.f32 %v248
    %v313 = vcvt.s32.f32 %v249
    %v314 = vcvt.s32.f32 %v250
    %v315 = vcvt.s32.f32 %v251
    %v316 = vcvt.s32.f32 %v252
    %v317 = vcvt.s32.f32 %v253
    %v318 = vcvt.s32.f32 %v254
    %v319 = vcvt.s32.f32 %v255
    %v320 = vcvt.s32.f32 %v256
    %v321 = vcvt.s32.f32 %v257
    %v323 = vlaneseq
    %v324 = vshrl.u32 %v323, 7
    %v325 = vsub.s32 0, %v324
    %v326 = vrot.slane %v190, %v325
    %v327 = vlaneseq
    %v328 = vshrl.u32 %v327, 7
    %v329 = vsub.s32 2, %v328
    %v330 = vrot.slane %v190, %v329
    %v331 = vlaneseq
    %v332 = vshrl.u32 %v331, 7
    %v333 = vsub.s32 4, %v332
    %v334 = vrot.slane %v190, %v333
    %v335 = vlaneseq
    %v336 = vshrl.u32 %v335, 7
    %v337 = vsub.s32 6, %v336
    %v338 = vrot.slane %v190, %v337
    %v343 = vlaneseq
    %v344 = vshrl.u32 %v343, 7
    %v345 = vsub.s32 0, %v344
    %v346 = vrot.slane %v326, %v345
    %v347 = vlaneseq
    %v348 = vshrl.u32 %v347, 7
    %v349 = vsub.s32 0, %v348
    %v350 = vrot.slane %v330, %v349
    %v351 = vlaneseq
    %v352 = vshrl.u32 %v351, 7
    %v353 = vsub.s32 0, %v352
    %v354 = vrot.slane %v334, %v353
    %v355 = vlaneseq
    %v356 = vshrl.u32 %v355, 7
    %v357 = vsub.s32 0, %v356
    %v358 = vrot.slane %v338, %v357
    %v359 = vmul.f32 %v258, %v346
    %v360 = vmul.f32 %v259, %v350
    %v361 = vmul.f32 %v260, %v354
    %v362 = vmul.f32 %v261, %v358
    %v363 = vmul.f32 %v262, %v346
    %v364 = vmul.f32 %v263, %v350
    %v365 = vmul.f32 %v264, %v354
    %v366 = vmul.f32 %v265, %v358
    %v367 = vmul.f32 %v266, %v346
    %v368 = vmul.f32 %v267, %v350
    %v369 = vmul.f32 %v268, %v354
    %v370 = vmul.f32 %v269, %v358
    %v371 = vmul.f32 %v270, %v346
    %v372 = vmul.f32 %v271, %v350
    %v373 = vmul.f32 %v272, %v354
    %v374 = vmul.f32 %v273, %v358
    %v375 = vmul.f32 %v274, %v346
    %v376 = vmul.f32 %v275, %v350
    %v377 = vmul.f32 %v276, %v354
    %v378 = vmul.f32 %v277, %v358
    %v379 = vmul.f32 %v278, %v346
    %v380 = vmul.f32 %v279, %v350
    %v381 = vmul.f32 %v280, %v354
    %v382 = vmul.f32 %v281, %v358
    %v383 = vmul.f32 %v282, %v346
    %v384 = vmul.f32 %v283, %v350
    %v385 = vmul.f32 %v284, %v354
    %v386 = vmul.f32 %v285, %v358
    %v387 = vmul.f32 %v286, %v346
    %v388 = vmul.f32 %v287, %v350
    %v389 = vmul.f32 %v288, %v354
    %v390 = vmul.f32 %v289, %v358
    %v391 = vmul.f32 %v290, %v346
    %v392 = vmul.f32 %v291, %v350
    %v393 = vmul.f32 %v292, %v354
    %v394 = vmul.f32 %v293, %v358
    %v395 = vmul.f32 %v294, %v346
    %v396 = vmul.f32 %v295, %v350
    %v397 = vmul.f32 %v296, %v354
    %v398 = vmul.f32 %v297, %v358
    %v399 = vmul.f32 %v298, %v346
    %v400 = vmul.f32 %v299, %v350
    %v401 = vmul.f32 %v300, %v354
    %v402 = vmul.f32 %v301, %v358
    %v403 = vmul.f32 %v302, %v346
    %v404 = vmul.f32 %v303, %v350
    %v405 = vmul.f32 %v304, %v354
    %v406 = vmul.f32 %v305, %v358
    %v407 = vmul.f32 %v306, %v346
    %v408 = vmul.f32 %v307, %v350
    %v409 = vmul.f32 %v308, %v354
    %v410 = vmul.f32 %v309, %v358
    %v411 = vmul.f32 %v310, %v346
    %v412 = vmul.f32 %v311, %v350
    %v413 = vmul.f32 %v312, %v354
    %v414 = vmul.f32 %v313, %v358
    %v415 = vmul.f32 %v314, %v346
    %v416 = vmul.f32 %v315, %v350
    %v417 = vmul.f32 %v316, %v354
    %v418 = vmul.f32 %v317, %v358
    %v419 = vmul.f32 %v318, %v346
    %v420 = vmul.f32 %v319, %v350
    %v421 = vmul.f32 %v320, %v354
    %v422 = vmul.f32 %v321, %v358
    %v424 = vlaneseq
    %v425 = vshrl.u32 %v424, 7
    %v426 = vsub.s32 0, %v425
    %v427 = vrot.slane %v191, %v426
    %v428 = vlaneseq
    %v429 = vshrl.u32 %v428, 7
    %v430 = vsub.s32 2, %v429
    %v431 = vrot.slane %v191, %v430
    %v432 = vlaneseq
    %v433 = vshrl.u32 %v432, 7
    %v434 = vsub.s32 4, %v433
    %v435 = vrot.slane %v191, %v434
    %v436 = vlaneseq
    %v437 = vshrl.u32 %v436, 7
    %v438 = vsub.s32 6, %v437
    %v439 = vrot.slane %v191, %v438
    %v444 = vlaneseq
    %v445 = vshrl.u32 %v444, 7
    %v446 = vsub.s32 0, %v445
    %v447 = vrot.slane %v427, %v446
    %v448 = vlaneseq
    %v449 = vshrl.u32 %v448, 7
    %v450 = vsub.s32 0, %v449
    %v451 = vrot.slane %v431, %v450
    %v452 = vlaneseq
    %v453 = vshrl.u32 %v452, 7
    %v454 = vsub.s32 0, %v453
    %v455 = vrot.slane %v435, %v454
    %v456 = vlaneseq
    %v457 = vshrl.u32 %v456, 7
    %v458 = vsub.s32 0, %v457
    %v459 = vrot.slane %v439, %v458
    %v460 = vadd.f32 %v359, %v447
    %v461 = vadd.f32 %v360, %v451
    %v462 = vadd.f32 %v361, %v455
    %v463 = vadd.f32 %v362, %v459
    %v464 = vadd.f32 %v363, %v447
    %v465 = vadd.f32 %v364, %v451
    %v466 = vadd.f32 %v365, %v455
    %v467 = vadd.f32 %v366, %v459
    %v468 = vadd.f32 %v367, %v447
    %v469 = vadd.f32 %v368, %v451
    %v470 = vadd.f32 %v369, %v455
    %v471 = vadd.f32 %v370, %v459
    %v472 = vadd.f32 %v371, %v447
    %v473 = vadd.f32 %v372, %v451
    %v474 = vadd.f32 %v373, %v455
    %v475 = vadd.f32 %v374, %v459
    %v476 = vadd.f32 %v375, %v447
    %v477 = vadd.f32 %v376, %v451
    %v478 = vadd.f32 %v377, %v455
    %v479 = vadd.f32 %v378, %v459
    %v480 = vadd.f32 %v379, %v447
    %v481 = vadd.f32 %v380, %v451
    %v482 = vadd.f32 %v381, %v455
    %v483 = vadd.f32 %v382, %v459
    %v484 = vadd.f32 %v383, %v447
    %v485 = vadd.f32 %v384, %v451
    %v486 = vadd.f32 %v385, %v455
    %v487 = vadd.f32 %v386, %v459
    %v488 = vadd.f32 %v387, %v447
    %v489 = vadd.f32 %v388, %v451
    %v490 = vadd.f32 %v389, %v455
    %v491 = vadd.f32 %v390, %v459
    %v492 = vadd.f32 %v391, %v447
    %v493 = vadd.f32 %v392, %v451
    %v494 = vadd.f32 %v393, %v455
    %v495 = vadd.f32 %v394, %v459
    %v496 = vadd.f32 %v395, %v447
    %v497 = vadd.f32 %v396, %v451
    %v498 = vadd.f32 %v397, %v455
    %v499 = vadd.f32 %v398, %v459
    %v500 = vadd.f32 %v399, %v447
    %v501 = vadd.f32 %v400, %v451
    %v502 = vadd.f32 %v401, %v455
    %v503 = vadd.f32 %v402, %v459
    %v504 = vadd.f32 %v403, %v447
    %v505 = vadd.f32 %v404, %v451
    %v506 = vadd.f32 %v405, %v455
    %v507 = vadd.f32 %v406, %v459
    %v508 = vadd.f32 %v407, %v447
    %v509 = vadd.f32 %v408, %v451
    %v510 = vadd.f32 %v409, %v455
    %v511 = vadd.f32 %v410, %v459
    %v512 = vadd.f32 %v411, %v447
    %v513 = vadd.f32 %v412, %v451
    %v514 = vadd.f32 %v413, %v455
    %v515 = vadd.f32 %v414, %v459
    %v516 = vadd.f32 %v415, %v447
    %v517 = vadd.f32 %v416, %v451
    %v518 = vadd.f32 %v417, %v455
    %v519 = vadd.f32 %v418, %v459
    %v520 = vadd.f32 %v419, %v447
    %v521 = vadd.f32 %v420, %v451
    %v522 = vadd.f32 %v421, %v455
    %v523 = vadd.f32 %v422, %v459
    %v524 = vpack.c.bf16 %v464, %v460
    %v525 = vpack.c.bf16 %v465, %v461
    %v526 = vpack.c.bf16 %v466, %v462
    %v527 = vpack.c.bf16 %v467, %v463
    %v528 = vpack.c.bf16 %v472, %v468
    %v529 = vpack.c.bf16 %v473, %v469
    %v530 = vpack.c.bf16 %v474, %v470
    %v531 = vpack.c.bf16 %v475, %v471
    %v532 = vpack.c.bf16 %v480, %v476
    %v533 = vpack.c.bf16 %v481, %v477
    %v534 = vpack.c.bf16 %v482, %v478
    %v535 = vpack.c.bf16 %v483, %v479
    %v536 = vpack.c.bf16 %v488, %v484
    %v537 = vpack.c.bf16 %v489, %v485
    %v538 = vpack.c.bf16 %v490, %v486
    %v539 = vpack.c.bf16 %v491, %v487
    %v540 = vpack.c.bf16 %v496, %v492
    %v541 = vpack.c.bf16 %v497, %v493
    %v542 = vpack.c.bf16 %v498, %v494
    %v543 = vpack.c.bf16 %v499, %v495
    %v544 = vpack.c.bf16 %v504, %v500
    %v545 = vpack.c.bf16 %v505, %v501
    %v546 = vpack.c.bf16 %v506, %v502
    %v547 = vpack.c.bf16 %v507, %v503
    %v548 = vpack.c.bf16 %v512, %v508
    %v549 = vpack.c.bf16 %v513, %v509
    %v550 = vpack.c.bf16 %v514, %v510
    %v551 = vpack.c.bf16 %v515, %v511
    %v552 = vpack.c.bf16 %v520, %v516
    %v553 = vpack.c.bf16 %v521, %v517
    %v554 = vpack.c.bf16 %v522, %v518
    %v555 = vpack.c.bf16 %v523, %v519
    %v556 = vunpack.c.0.s8 %v158
    %v557 = vunpack.c.0.s8 %v159
    %v558 = vunpack.c.0.s8 %v160
    %v559 = vunpack.c.0.s8 %v161
    %v560 = vunpack.c.1.s8 %v158
    %v561 = vunpack.c.1.s8 %v159
    %v562 = vunpack.c.1.s8 %v160
    %v563 = vunpack.c.1.s8 %v161
    %v564 = vunpack.c.2.s8 %v158
    %v565 = vunpack.c.2.s8 %v159
    %v566 = vunpack.c.2.s8 %v160
    %v567 = vunpack.c.2.s8 %v161
    %v568 = vunpack.c.3.s8 %v158
    %v569 = vunpack.c.3.s8 %v159
    %v570 = vunpack.c.3.s8 %v160
    %v571 = vunpack.c.3.s8 %v161
    %v572 = vunpack.c.0.s8 %v162
    %v573 = vunpack.c.0.s8 %v163
    %v574 = vunpack.c.0.s8 %v164
    %v575 = vunpack.c.0.s8 %v165
    %v576 = vunpack.c.1.s8 %v162
    %v577 = vunpack.c.1.s8 %v163
    %v578 = vunpack.c.1.s8 %v164
    %v579 = vunpack.c.1.s8 %v165
    %v580 = vunpack.c.2.s8 %v162
    %v581 = vunpack.c.2.s8 %v163
    %v582 = vunpack.c.2.s8 %v164
    %v583 = vunpack.c.2.s8 %v165
    %v584 = vunpack.c.3.s8 %v162
    %v585 = vunpack.c.3.s8 %v163
    %v586 = vunpack.c.3.s8 %v164
    %v587 = vunpack.c.3.s8 %v165
    %v588 = vunpack.c.0.s8 %v166
    %v589 = vunpack.c.0.s8 %v167
    %v590 = vunpack.c.0.s8 %v168
    %v591 = vunpack.c.0.s8 %v169
    %v592 = vunpack.c.1.s8 %v166
    %v593 = vunpack.c.1.s8 %v167
    %v594 = vunpack.c.1.s8 %v168
    %v595 = vunpack.c.1.s8 %v169
    %v596 = vunpack.c.2.s8 %v166
    %v597 = vunpack.c.2.s8 %v167
    %v598 = vunpack.c.2.s8 %v168
    %v599 = vunpack.c.2.s8 %v169
    %v600 = vunpack.c.3.s8 %v166
    %v601 = vunpack.c.3.s8 %v167
    %v602 = vunpack.c.3.s8 %v168
    %v603 = vunpack.c.3.s8 %v169
    %v604 = vunpack.c.0.s8 %v170
    %v605 = vunpack.c.0.s8 %v171
    %v606 = vunpack.c.0.s8 %v172
    %v607 = vunpack.c.0.s8 %v173
    %v608 = vunpack.c.1.s8 %v170
    %v609 = vunpack.c.1.s8 %v171
    %v610 = vunpack.c.1.s8 %v172
    %v611 = vunpack.c.1.s8 %v173
    %v612 = vunpack.c.2.s8 %v170
    %v613 = vunpack.c.2.s8 %v171
    %v614 = vunpack.c.2.s8 %v172
    %v615 = vunpack.c.2.s8 %v173
    %v616 = vunpack.c.3.s8 %v170
    %v617 = vunpack.c.3.s8 %v171
    %v618 = vunpack.c.3.s8 %v172
    %v619 = vunpack.c.3.s8 %v173
    %v620 = vcvt.s32.f32 %v556
    %v621 = vcvt.s32.f32 %v557
    %v622 = vcvt.s32.f32 %v558
    %v623 = vcvt.s32.f32 %v559
    %v624 = vcvt.s32.f32 %v560
    %v625 = vcvt.s32.f32 %v561
    %v626 = vcvt.s32.f32 %v562
    %v627 = vcvt.s32.f32 %v563
    %v628 = vcvt.s32.f32 %v564
    %v629 = vcvt.s32.f32 %v565
    %v630 = vcvt.s32.f32 %v566
    %v631 = vcvt.s32.f32 %v567
    %v632 = vcvt.s32.f32 %v568
    %v633 = vcvt.s32.f32 %v569
    %v634 = vcvt.s32.f32 %v570
    %v635 = vcvt.s32.f32 %v571
    %v636 = vcvt.s32.f32 %v572
    %v637 = vcvt.s32.f32 %v573
    %v638 = vcvt.s32.f32 %v574
    %v639 = vcvt.s32.f32 %v575
    %v640 = vcvt.s32.f32 %v576
    %v641 = vcvt.s32.f32 %v577
    %v642 = vcvt.s32.f32 %v578
    %v643 = vcvt.s32.f32 %v579
    %v644 = vcvt.s32.f32 %v580
    %v645 = vcvt.s32.f32 %v581
    %v646 = vcvt.s32.f32 %v582
    %v647 = vcvt.s32.f32 %v583
    %v648 = vcvt.s32.f32 %v584
    %v649 = vcvt.s32.f32 %v585
    %v650 = vcvt.s32.f32 %v586
    %v651 = vcvt.s32.f32 %v587
    %v652 = vcvt.s32.f32 %v588
    %v653 = vcvt.s32.f32 %v589
    %v654 = vcvt.s32.f32 %v590
    %v655 = vcvt.s32.f32 %v591
    %v656 = vcvt.s32.f32 %v592
    %v657 = vcvt.s32.f32 %v593
    %v658 = vcvt.s32.f32 %v594
    %v659 = vcvt.s32.f32 %v595
    %v660 = vcvt.s32.f32 %v596
    %v661 = vcvt.s32.f32 %v597
    %v662 = vcvt.s32.f32 %v598
    %v663 = vcvt.s32.f32 %v599
    %v664 = vcvt.s32.f32 %v600
    %v665 = vcvt.s32.f32 %v601
    %v666 = vcvt.s32.f32 %v602
    %v667 = vcvt.s32.f32 %v603
    %v668 = vcvt.s32.f32 %v604
    %v669 = vcvt.s32.f32 %v605
    %v670 = vcvt.s32.f32 %v606
    %v671 = vcvt.s32.f32 %v607
    %v672 = vcvt.s32.f32 %v608
    %v673 = vcvt.s32.f32 %v609
    %v674 = vcvt.s32.f32 %v610
    %v675 = vcvt.s32.f32 %v611
    %v676 = vcvt.s32.f32 %v612
    %v677 = vcvt.s32.f32 %v613
    %v678 = vcvt.s32.f32 %v614
    %v679 = vcvt.s32.f32 %v615
    %v680 = vcvt.s32.f32 %v616
    %v681 = vcvt.s32.f32 %v617
    %v682 = vcvt.s32.f32 %v618
    %v683 = vcvt.s32.f32 %v619
    %v685 = vlaneseq
    %v686 = vshrl.u32 %v685, 7
    %v687 = vsub.s32 0, %v686
    %v688 = vrot.slane %v192, %v687
    %v689 = vlaneseq
    %v690 = vshrl.u32 %v689, 7
    %v691 = vsub.s32 2, %v690
    %v692 = vrot.slane %v192, %v691
    %v693 = vlaneseq
    %v694 = vshrl.u32 %v693, 7
    %v695 = vsub.s32 4, %v694
    %v696 = vrot.slane %v192, %v695
    %v697 = vlaneseq
    %v698 = vshrl.u32 %v697, 7
    %v699 = vsub.s32 6, %v698
    %v700 = vrot.slane %v192, %v699
    %v705 = vlaneseq
    %v706 = vshrl.u32 %v705, 7
    %v707 = vsub.s32 0, %v706
    %v708 = vrot.slane %v688, %v707
    %v709 = vlaneseq
    %v710 = vshrl.u32 %v709, 7
    %v711 = vsub.s32 0, %v710
    %v712 = vrot.slane %v692, %v711
    %v713 = vlaneseq
    %v714 = vshrl.u32 %v713, 7
    %v715 = vsub.s32 0, %v714
    %v716 = vrot.slane %v696, %v715
    %v717 = vlaneseq
    %v718 = vshrl.u32 %v717, 7
    %v719 = vsub.s32 0, %v718
    %v720 = vrot.slane %v700, %v719
    %v721 = vmul.f32 %v620, %v708
    %v722 = vmul.f32 %v621, %v712
    %v723 = vmul.f32 %v622, %v716
    %v724 = vmul.f32 %v623, %v720
    %v725 = vmul.f32 %v624, %v708
    %v726 = vmul.f32 %v625, %v712
    %v727 = vmul.f32 %v626, %v716
    %v728 = vmul.f32 %v627, %v720
    %v729 = vmul.f32 %v628, %v708
    %v730 = vmul.f32 %v629, %v712
    %v731 = vmul.f32 %v630, %v716
    %v732 = vmul.f32 %v631, %v720
    %v733 = vmul.f32 %v632, %v708
    %v734 = vmul.f32 %v633, %v712
    %v735 = vmul.f32 %v634, %v716
    %v736 = vmul.f32 %v635, %v720
    %v737 = vmul.f32 %v636, %v708
    %v738 = vmul.f32 %v637, %v712
    %v739 = vmul.f32 %v638, %v716
    %v740 = vmul.f32 %v639, %v720
    %v741 = vmul.f32 %v640, %v708
    %v742 = vmul.f32 %v641, %v712
    %v743 = vmul.f32 %v642, %v716
    %v744 = vmul.f32 %v643, %v720
    %v745 = vmul.f32 %v644, %v708
    %v746 = vmul.f32 %v645, %v712
    %v747 = vmul.f32 %v646, %v716
    %v748 = vmul.f32 %v647, %v720
    %v749 = vmul.f32 %v648, %v708
    %v750 = vmul.f32 %v649, %v712
    %v751 = vmul.f32 %v650, %v716
    %v752 = vmul.f32 %v651, %v720
    %v753 = vmul.f32 %v652, %v708
    %v754 = vmul.f32 %v653, %v712
    %v755 = vmul.f32 %v654, %v716
    %v756 = vmul.f32 %v655, %v720
    %v757 = vmul.f32 %v656, %v708
    %v758 = vmul.f32 %v657, %v712
    %v759 = vmul.f32 %v658, %v716
    %v760 = vmul.f32 %v659, %v720
    %v761 = vmul.f32 %v660, %v708
    %v762 = vmul.f32 %v661, %v712
    %v763 = vmul.f32 %v662, %v716
    %v764 = vmul.f32 %v663, %v720
    %v765 = vmul.f32 %v664, %v708
    %v766 = vmul.f32 %v665, %v712
    %v767 = vmul.f32 %v666, %v716
    %v768 = vmul.f32 %v667, %v720
    %v769 = vmul.f32 %v668, %v708
    %v770 = vmul.f32 %v669, %v712
    %v771 = vmul.f32 %v670, %v716
    %v772 = vmul.f32 %v671, %v720
    %v773 = vmul.f32 %v672, %v708
    %v774 = vmul.f32 %v673, %v712
    %v775 = vmul.f32 %v674, %v716
    %v776 = vmul.f32 %v675, %v720
    %v777 = vmul.f32 %v676, %v708
    %v778 = vmul.f32 %v677, %v712
    %v779 = vmul.f32 %v678, %v716
    %v780 = vmul.f32 %v679, %v720
    %v781 = vmul.f32 %v680, %v708
    %v782 = vmul.f32 %v681, %v712
    %v783 = vmul.f32 %v682, %v716
    %v784 = vmul.f32 %v683, %v720
    %v786 = vlaneseq
    %v787 = vshrl.u32 %v786, 7
    %v788 = vsub.s32 0, %v787
    %v789 = vrot.slane %v193, %v788
    %v790 = vlaneseq
    %v791 = vshrl.u32 %v790, 7
    %v792 = vsub.s32 2, %v791
    %v793 = vrot.slane %v193, %v792
    %v794 = vlaneseq
    %v795 = vshrl.u32 %v794, 7
    %v796 = vsub.s32 4, %v795
    %v797 = vrot.slane %v193, %v796
    %v798 = vlaneseq
    %v799 = vshrl.u32 %v798, 7
    %v800 = vsub.s32 6, %v799
    %v801 = vrot.slane %v193, %v800
    %v806 = vlaneseq
    %v807 = vshrl.u32 %v806, 7
    %v808 = vsub.s32 0, %v807
    %v809 = vrot.slane %v789, %v808
    %v810 = vlaneseq
    %v811 = vshrl.u32 %v810, 7
    %v812 = vsub.s32 0, %v811
    %v813 = vrot.slane %v793, %v812
    %v814 = vlaneseq
    %v815 = vshrl.u32 %v814, 7
    %v816 = vsub.s32 0, %v815
    %v817 = vrot.slane %v797, %v816
    %v818 = vlaneseq
    %v819 = vshrl.u32 %v818, 7
    %v820 = vsub.s32 0, %v819
    %v821 = vrot.slane %v801, %v820
    %v822 = vadd.f32 %v721, %v809
    %v823 = vadd.f32 %v722, %v813
    %v824 = vadd.f32 %v723, %v817
    %v825 = vadd.f32 %v724, %v821
    %v826 = vadd.f32 %v725, %v809
    %v827 = vadd.f32 %v726, %v813
    %v828 = vadd.f32 %v727, %v817
    %v829 = vadd.f32 %v728, %v821
    %v830 = vadd.f32 %v729, %v809
    %v831 = vadd.f32 %v730, %v813
    %v832 = vadd.f32 %v731, %v817
    %v833 = vadd.f32 %v732, %v821
    %v834 = vadd.f32 %v733, %v809
    %v835 = vadd.f32 %v734, %v813
    %v836 = vadd.f32 %v735, %v817
    %v837 = vadd.f32 %v736, %v821
    %v838 = vadd.f32 %v737, %v809
    %v839 = vadd.f32 %v738, %v813
    %v840 = vadd.f32 %v739, %v817
    %v841 = vadd.f32 %v740, %v821
    %v842 = vadd.f32 %v741, %v809
    %v843 = vadd.f32 %v742, %v813
    %v844 = vadd.f32 %v743, %v817
    %v845 = vadd.f32 %v744, %v821
    %v846 = vadd.f32 %v745, %v809
    %v847 = vadd.f32 %v746, %v813
    %v848 = vadd.f32 %v747, %v817
    %v849 = vadd.f32 %v748, %v821
    %v850 = vadd.f32 %v749, %v809
    %v851 = vadd.f32 %v750, %v813
    %v852 = vadd.f32 %v751, %v817
    %v853 = vadd.f32 %v752, %v821
    %v854 = vadd.f32 %v753, %v809
    %v855 = vadd.f32 %v754, %v813
    %v856 = vadd.f32 %v755, %v817
    %v857 = vadd.f32 %v756, %v821
    %v858 = vadd.f32 %v757, %v809
    %v859 = vadd.f32 %v758, %v813
    %v860 = vadd.f32 %v759, %v817
    %v861 = vadd.f32 %v760, %v821
    %v862 = vadd.f32 %v761, %v809
    %v863 = vadd.f32 %v762, %v813
    %v864 = vadd.f32 %v763, %v817
    %v865 = vadd.f32 %v764, %v821
    %v866 = vadd.f32 %v765, %v809
    %v867 = vadd.f32 %v766, %v813
    %v868 = vadd.f32 %v767, %v817
    %v869 = vadd.f32 %v768, %v821
    %v870 = vadd.f32 %v769, %v809
    %v871 = vadd.f32 %v770, %v813
    %v872 = vadd.f32 %v771, %v817
    %v873 = vadd.f32 %v772, %v821
    %v874 = vadd.f32 %v773, %v809
    %v875 = vadd.f32 %v774, %v813
    %v876 = vadd.f32 %v775, %v817
    %v877 = vadd.f32 %v776, %v821
    %v878 = vadd.f32 %v777, %v809
    %v879 = vadd.f32 %v778, %v813
    %v880 = vadd.f32 %v779, %v817
    %v881 = vadd.f32 %v780, %v821
    %v882 = vadd.f32 %v781, %v809
    %v883 = vadd.f32 %v782, %v813
    %v884 = vadd.f32 %v783, %v817
    %v885 = vadd.f32 %v784, %v821
    %v886 = vpack.c.bf16 %v826, %v822
    %v887 = vpack.c.bf16 %v827, %v823
    %v888 = vpack.c.bf16 %v828, %v824
    %v889 = vpack.c.bf16 %v829, %v825
    %v890 = vpack.c.bf16 %v834, %v830
    %v891 = vpack.c.bf16 %v835, %v831
    %v892 = vpack.c.bf16 %v836, %v832
    %v893 = vpack.c.bf16 %v837, %v833
    %v894 = vpack.c.bf16 %v842, %v838
    %v895 = vpack.c.bf16 %v843, %v839
    %v896 = vpack.c.bf16 %v844, %v840
    %v897 = vpack.c.bf16 %v845, %v841
    %v898 = vpack.c.bf16 %v850, %v846
    %v899 = vpack.c.bf16 %v851, %v847
    %v900 = vpack.c.bf16 %v852, %v848
    %v901 = vpack.c.bf16 %v853, %v849
    %v902 = vpack.c.bf16 %v858, %v854
    %v903 = vpack.c.bf16 %v859, %v855
    %v904 = vpack.c.bf16 %v860, %v856
    %v905 = vpack.c.bf16 %v861, %v857
    %v906 = vpack.c.bf16 %v866, %v862
    %v907 = vpack.c.bf16 %v867, %v863
    %v908 = vpack.c.bf16 %v868, %v864
    %v909 = vpack.c.bf16 %v869, %v865
    %v910 = vpack.c.bf16 %v874, %v870
    %v911 = vpack.c.bf16 %v875, %v871
    %v912 = vpack.c.bf16 %v876, %v872
    %v913 = vpack.c.bf16 %v877, %v873
    %v914 = vpack.c.bf16 %v882, %v878
    %v915 = vpack.c.bf16 %v883, %v879
    %v916 = vpack.c.bf16 %v884, %v880
    %v917 = vpack.c.bf16 %v885, %v881
    %v918 = vld [vmem:[#allocation2] sm:$0xff]
    %v919 = vld [vmem:[#allocation2 + $0x8] sm:$0xff]
    %v920 = vld [vmem:[#allocation2 + $0x10] sm:$0xff]
    %v921 = vld [vmem:[#allocation2 + $0x18] sm:$0xff]
    %v922 = vld [vmem:[#allocation2 + $0x20] sm:$0xff]
    %v923 = vld [vmem:[#allocation2 + $0x28] sm:$0xff]
    %v924 = vld [vmem:[#allocation2 + $0x30] sm:$0xff]
    %v925 = vld [vmem:[#allocation2 + $0x38] sm:$0xff]
    %v928 = vunpack.c.l.b16 %v124
    %v929 = vunpack.c.l.b16 %v125
    %v930 = vpack.c.b16 %v929, %v928
    %932 = vmatprep.subr.bf16.mxu0 %v553
    %933 = vmatpush1.bf16.msra.mxu0 %v552
    %934 = vmatprep.subr.bf16.mxu0 %v549
    %935 = vmatpush1.bf16.msra.mxu0 %v548
    %936 = vmatprep.subr.bf16.mxu0 %v545
    %937 = vmatpush1.bf16.msra.mxu0 %v544
    %938 = vmatprep.subr.bf16.mxu0 %v541
    %939 = vmatpush1.bf16.msra.mxu0 %v540
    %940 = vmatprep.subr.bf16.mxu0 %v537
    %941 = vmatpush1.bf16.msra.mxu0 %v536
    %942 = vmatprep.subr.bf16.mxu0 %v533
    %943 = vmatpush1.bf16.msra.mxu0 %v532
    %944 = vmatprep.subr.bf16.mxu0 %v529
    %945 = vmatpush1.bf16.msra.mxu0 %v528
    %946 = vmatprep.subr.bf16.mxu0 %v525
    %947 = vmatpush1.bf16.msra.mxu0 %v524
    %948 = vmatprep.subr.bf16.mxu0 0
    %949 = vmatpush2.bf16.msra.mxu0 0
    %950 = vmatprep.subr.bf16.mxu0 0
    %951 = vmatpush2.bf16.msra.mxu0 0
    %952 = vmatprep.subr.bf16.mxu0 0
    %953 = vmatpush2.bf16.msra.mxu0 0
    %954 = vmatprep.subr.bf16.mxu0 0
    %955 = vmatpush2.bf16.msra.mxu0 0
    %956 = vmatprep.subr.bf16.mxu0 0
    %957 = vmatpush2.bf16.msra.mxu0 0
    %958 = vmatprep.subr.bf16.mxu0 0
    %959 = vmatpush2.bf16.msra.mxu0 0
    %960 = vmatprep.subr.bf16.mxu0 0
    %961 = vmatpush2.bf16.msra.mxu0 0
    %962 = vmatprep.subr.bf16.mxu0 0
    %963 = vmatpush2.bf16.msra.mxu0 0
    %964 = vmatprep.mubr.bf16.mxu0 0
    %965 = vmatmul.mubr.bf16.gmra.mxu0 %v930
    %v966 = vpop.f32.mrf.mxu0
    %v967 = vadd.f32 0.0, %v966
    %v968 = vpop.f32.mrf.mxu0
    %v969 = vadd.f32 0.0, %v968
    %v970 = vpop.f32.mrf.mxu0
    %v971 = vadd.f32 0.0, %v970
    %v972 = vpop.f32.mrf.mxu0
    %v973 = vadd.f32 0.0, %v972
    %974 = vdwg.mxu0
    %975 = vmatprep.subr.bf16.mxu0 %v555
    %976 = vmatpush1.bf16.msra.mxu0 %v554
    %977 = vmatprep.subr.bf16.mxu0 %v551
    %978 = vmatpush1.bf16.msra.mxu0 %v550
    %979 = vmatprep.subr.bf16.mxu0 %v547
    %980 = vmatpush1.bf16.msra.mxu0 %v546
    %981 = vmatprep.subr.bf16.mxu0 %v543
    %982 = vmatpush1.bf16.msra.mxu0 %v542
    %983 = vmatprep.subr.bf16.mxu0 %v539
    %984 = vmatpush1.bf16.msra.mxu0 %v538
    %985 = vmatprep.subr.bf16.mxu0 %v535
    %986 = vmatpush1.bf16.msra.mxu0 %v534
    %987 = vmatprep.subr.bf16.mxu0 %v531
    %988 = vmatpush1.bf16.msra.mxu0 %v530
    %989 = vmatprep.subr.bf16.mxu0 %v527
    %990 = vmatpush1.bf16.msra.mxu0 %v526
    %991 = vmatprep.subr.bf16.mxu0 0
    %992 = vmatpush2.bf16.msra.mxu0 0
    %993 = vmatprep.subr.bf16.mxu0 0
    %994 = vmatpush2.bf16.msra.mxu0 0
    %995 = vmatprep.subr.bf16.mxu0 0
    %996 = vmatpush2.bf16.msra.mxu0 0
    %997 = vmatprep.subr.bf16.mxu0 0
    %998 = vmatpush2.bf16.msra.mxu0 0
    %999 = vmatprep.subr.bf16.mxu0 0
    %1000 = vmatpush2.bf16.msra.mxu0 0
    %1001 = vmatprep.subr.bf16.mxu0 0
    %1002 = vmatpush2.bf16.msra.mxu0 0
    %1003 = vmatprep.subr.bf16.mxu0 0
    %1004 = vmatpush2.bf16.msra.mxu0 0
    %1005 = vmatprep.subr.bf16.mxu0 0
    %1006 = vmatpush2.bf16.msra.mxu0 0
    %1007 = vmatprep.mubr.bf16.mxu0 0
    %1008 = vmatmul.mubr.bf16.gmra.mxu0 %v930
    %v1009 = vpop.f32.mrf.mxu0
    %v1010 = vadd.f32 0.0, %v1009
    %v1011 = vpop.f32.mrf.mxu0
    %v1012 = vadd.f32 0.0, %v1011
    %v1013 = vpop.f32.mrf.mxu0
    %v1014 = vadd.f32 0.0, %v1013
    %v1015 = vpop.f32.mrf.mxu0
    %v1016 = vadd.f32 0.0, %v1015
    %1017 = vdwg.mxu0
    %v1018 = vadd.f32 %v918, %v967
    %v1019 = vadd.f32 %v919, %v969
    %v1020 = vadd.f32 %v920, %v1010
    %v1021 = vadd.f32 %v921, %v1012
    %v1022 = vadd.f32 %v922, %v971
    %v1023 = vadd.f32 %v923, %v973
    %v1024 = vadd.f32 %v924, %v1014
    %v1025 = vadd.f32 %v925, %v1016
    %1026 = vst [vmem:[#allocation2] sm:$0xff] %v1018
    %1027 = vst [vmem:[#allocation2 + $0x8] sm:$0xff] %v1019
    %1028 = vst [vmem:[#allocation2 + $0x10] sm:$0xff] %v1020
    %1029 = vst [vmem:[#allocation2 + $0x18] sm:$0xff] %v1021
    %1030 = vst [vmem:[#allocation2 + $0x20] sm:$0xff] %v1022
    %1031 = vst [vmem:[#allocation2 + $0x28] sm:$0xff] %v1023
    %1032 = vst [vmem:[#allocation2 + $0x30] sm:$0xff] %v1024
    %1033 = vst [vmem:[#allocation2 + $0x38] sm:$0xff] %v1025
    %v1034 = vld [vmem:[#allocation3] sm:$0xff]
    %v1035 = vld [vmem:[#allocation3 + $0x8] sm:$0xff]
    %v1036 = vld [vmem:[#allocation3 + $0x10] sm:$0xff]
    %v1037 = vld [vmem:[#allocation3 + $0x18] sm:$0xff]
    %v1038 = vld [vmem:[#allocation3 + $0x20] sm:$0xff]
    %v1039 = vld [vmem:[#allocation3 + $0x28] sm:$0xff]
    %v1040 = vld [vmem:[#allocation3 + $0x30] sm:$0xff]
    %v1041 = vld [vmem:[#allocation3 + $0x38] sm:$0xff]
    %1042 = vmatprep.subr.bf16.mxu0 %v915
    %1043 = vmatpush1.bf16.msra.mxu0 %v914
    %1044 = vmatprep.subr.bf16.mxu0 %v911
    %1045 = vmatpush1.bf16.msra.mxu0 %v910
    %1046 = vmatprep.subr.bf16.mxu0 %v907
    %1047 = vmatpush1.bf16.msra.mxu0 %v906
    %1048 = vmatprep.subr.bf16.mxu0 %v903
    %1049 = vmatpush1.bf16.msra.mxu0 %v902
    %1050 = vmatprep.subr.bf16.mxu0 %v899
    %1051 = vmatpush1.bf16.msra.mxu0 %v898
    %1052 = vmatprep.subr.bf16.mxu0 %v895
    %1053 = vmatpush1.bf16.msra.mxu0 %v894
    %1054 = vmatprep.subr.bf16.mxu0 %v891
    %1055 = vmatpush1.bf16.msra.mxu0 %v890
    %1056 = vmatprep.subr.bf16.mxu0 %v887
    %1057 = vmatpush1.bf16.msra.mxu0 %v886
    %1058 = vmatprep.subr.bf16.mxu0 0
    %1059 = vmatpush2.bf16.msra.mxu0 0
    %1060 = vmatprep.subr.bf16.mxu0 0
    %1061 = vmatpush2.bf16.msra.mxu0 0
    %1062 = vmatprep.subr.bf16.mxu0 0
    %1063 = vmatpush2.bf16.msra.mxu0 0
    %1064 = vmatprep.subr.bf16.mxu0 0
    %1065 = vmatpush2.bf16.msra.mxu0 0
    %1066 = vmatprep.subr.bf16.mxu0 0
    %1067 = vmatpush2.bf16.msra.mxu0 0
    %1068 = vmatprep.subr.bf16.mxu0 0
    %1069 = vmatpush2.bf16.msra.mxu0 0
    %1070 = vmatprep.subr.bf16.mxu0 0
    %1071 = vmatpush2.bf16.msra.mxu0 0
    %1072 = vmatprep.subr.bf16.mxu0 0
    %1073 = vmatpush2.bf16.msra.mxu0 0
    %1074 = vmatprep.mubr.bf16.mxu0 0
    %1075 = vmatmul.mubr.bf16.gmra.mxu0 %v930
    %v1076 = vpop.f32.mrf.mxu0
    %v1077 = vadd.f32 0.0, %v1076
    %v1078 = vpop.f32.mrf.mxu0
    %v1079 = vadd.f32 0.0, %v1078
    %v1080 = vpop.f32.mrf.mxu0
    %v1081 = vadd.f32 0.0, %v1080
    %v1082 = vpop.f32.mrf.mxu0
    %v1083 = vadd.f32 0.0, %v1082
    %1084 = vdwg.mxu0
    %1085 = vmatprep.subr.bf16.mxu0 %v917
    %1086 = vmatpush1.bf16.msra.mxu0 %v916
    %1087 = vmatprep.subr.bf16.mxu0 %v913
    %1088 = vmatpush1.bf16.msra.mxu0 %v912
    %1089 = vmatprep.subr.bf16.mxu0 %v909
    %1090 = vmatpush1.bf16.msra.mxu0 %v908
    %1091 = vmatprep.subr.bf16.mxu0 %v905
    %1092 = vmatpush1.bf16.msra.mxu0 %v904
    %1093 = vmatprep.subr.bf16.mxu0 %v901
    %1094 = vmatpush1.bf16.msra.mxu0 %v900
    %1095 = vmatprep.subr.bf16.mxu0 %v897
    %1096 = vmatpush1.bf16.msra.mxu0 %v896
    %1097 = vmatprep.subr.bf16.mxu0 %v893
    %1098 = vmatpush1.bf16.msra.mxu0 %v892
    %1099 = vmatprep.subr.bf16.mxu0 %v889
    %1100 = vmatpush1.bf16.msra.mxu0 %v888
    %1101 = vmatprep.subr.bf16.mxu0 0
    %1102 = vmatpush2.bf16.msra.mxu0 0
    %1103 = vmatprep.subr.bf16.mxu0 0
    %1104 = vmatpush2.bf16.msra.mxu0 0
    %1105 = vmatprep.subr.bf16.mxu0 0
    %1106 = vmatpush2.bf16.msra.mxu0 0
    %1107 = vmatprep.subr.bf16.mxu0 0
    %1108 = vmatpush2.bf16.msra.mxu0 0
    %1109 = vmatprep.subr.bf16.mxu0 0
    %1110 = vmatpush2.bf16.msra.mxu0 0
    %1111 = vmatprep.subr.bf16.mxu0 0
    %1112 = vmatpush2.bf16.msra.mxu0 0
    %1113 = vmatprep.subr.bf16.mxu0 0
    %1114 = vmatpush2.bf16.msra.mxu0 0
    %1115 = vmatprep.subr.bf16.mxu0 0
    %1116 = vmatpush2.bf16.msra.mxu0 0
    %1117 = vmatprep.mubr.bf16.mxu0 0
    %1118 = vmatmul.mubr.bf16.gmra.mxu0 %v930
    %v1119 = vpop.f32.mrf.mxu0
    %v1120 = vadd.f32 0.0, %v1119
    %v1121 = vpop.f32.mrf.mxu0
    %v1122 = vadd.f32 0.0, %v1121
    %v1123 = vpop.f32.mrf.mxu0
    %v1124 = vadd.f32 0.0, %v1123
    %v1125 = vpop.f32.mrf.mxu0
    %v1126 = vadd.f32 0.0, %v1125
    %1127 = vdwg.mxu0
    %v1128 = vadd.f32 %v1034, %v1077
    %v1129 = vadd.f32 %v1035, %v1079
    %v1130 = vadd.f32 %v1036, %v1120
    %v1131 = vadd.f32 %v1037, %v1122
    %v1132 = vadd.f32 %v1038, %v1081
    %v1133 = vadd.f32 %v1039, %v1083
    %v1134 = vadd.f32 %v1040, %v1124
    %v1135 = vadd.f32 %v1041, %v1126
    %1136 = vst [vmem:[#allocation3] sm:$0xff] %v1128
    %1137 = vst [vmem:[#allocation3 + $0x8] sm:$0xff] %v1129
    %1138 = vst [vmem:[#allocation3 + $0x10] sm:$0xff] %v1130
    %1139 = vst [vmem:[#allocation3 + $0x18] sm:$0xff] %v1131
    %1140 = vst [vmem:[#allocation3 + $0x20] sm:$0xff] %v1132
    %1141 = vst [vmem:[#allocation3 + $0x28] sm:$0xff] %v1133
    %1142 = vst [vmem:[#allocation3 + $0x30] sm:$0xff] %v1134
    %1143 = vst [vmem:[#allocation3 + $0x38] sm:$0xff] %v1135
    %v1144 = vunpack.c.0.s8 %v142
    %v1145 = vunpack.c.0.s8 %v143
    %v1146 = vunpack.c.0.s8 %v144
    %v1147 = vunpack.c.0.s8 %v145
    %v1148 = vunpack.c.1.s8 %v142
    %v1149 = vunpack.c.1.s8 %v143
    %v1150 = vunpack.c.1.s8 %v144
    %v1151 = vunpack.c.1.s8 %v145
    %v1152 = vunpack.c.2.s8 %v142
    %v1153 = vunpack.c.2.s8 %v143
    %v1154 = vunpack.c.2.s8 %v144
    %v1155 = vunpack.c.2.s8 %v145
    %v1156 = vunpack.c.3.s8 %v142
    %v1157 = vunpack.c.3.s8 %v143
    %v1158 = vunpack.c.3.s8 %v144
    %v1159 = vunpack.c.3.s8 %v145
    %v1160 = vunpack.c.0.s8 %v146
    %v1161 = vunpack.c.0.s8 %v147
    %v1162 = vunpack.c.0.s8 %v148
    %v1163 = vunpack.c.0.s8 %v149
    %v1164 = vunpack.c.1.s8 %v146
    %v1165 = vunpack.c.1.s8 %v147
    %v1166 = vunpack.c.1.s8 %v148
    %v1167 = vunpack.c.1.s8 %v149
    %v1168 = vunpack.c.2.s8 %v146
    %v1169 = vunpack.c.2.s8 %v147
    %v1170 = vunpack.c.2.s8 %v148
    %v1171 = vunpack.c.2.s8 %v149
    %v1172 = vunpack.c.3.s8 %v146
    %v1173 = vunpack.c.3.s8 %v147
    %v1174 = vunpack.c.3.s8 %v148
    %v1175 = vunpack.c.3.s8 %v149
    %v1176 = vunpack.c.0.s8 %v150
    %v1177 = vunpack.c.0.s8 %v151
    %v1178 = vunpack.c.0.s8 %v152
    %v1179 = vunpack.c.0.s8 %v153
    %v1180 = vunpack.c.1.s8 %v150
    %v1181 = vunpack.c.1.s8 %v151
    %v1182 = vunpack.c.1.s8 %v152
    %v1183 = vunpack.c.1.s8 %v153
    %v1184 = vunpack.c.2.s8 %v150
    %v1185 = vunpack.c.2.s8 %v151
    %v1186 = vunpack.c.2.s8 %v152
    %v1187 = vunpack.c.2.s8 %v153
    %v1188 = vunpack.c.3.s8 %v150
    %v1189 = vunpack.c.3.s8 %v151
    %v1190 = vunpack.c.3.s8 %v152
    %v1191 = vunpack.c.3.s8 %v153
    %v1192 = vunpack.c.0.s8 %v154
    %v1193 = vunpack.c.0.s8 %v155
    %v1194 = vunpack.c.0.s8 %v156
    %v1195 = vunpack.c.0.s8 %v157
    %v1196 = vunpack.c.1.s8 %v154
    %v1197 = vunpack.c.1.s8 %v155
    %v1198 = vunpack.c.1.s8 %v156
    %v1199 = vunpack.c.1.s8 %v157
    %v1200 = vunpack.c.2.s8 %v154
    %v1201 = vunpack.c.2.s8 %v155
    %v1202 = vunpack.c.2.s8 %v156
    %v1203 = vunpack.c.2.s8 %v157
    %v1204 = vunpack.c.3.s8 %v154
    %v1205 = vunpack.c.3.s8 %v155
    %v1206 = vunpack.c.3.s8 %v156
    %v1207 = vunpack.c.3.s8 %v157
    %v1208 = vcvt.s32.f32 %v1144
    %v1209 = vcvt.s32.f32 %v1145
    %v1210 = vcvt.s32.f32 %v1146
    %v1211 = vcvt.s32.f32 %v1147
    %v1212 = vcvt.s32.f32 %v1148
    %v1213 = vcvt.s32.f32 %v1149
    %v1214 = vcvt.s32.f32 %v1150
    %v1215 = vcvt.s32.f32 %v1151
    %v1216 = vcvt.s32.f32 %v1152
    %v1217 = vcvt.s32.f32 %v1153
    %v1218 = vcvt.s32.f32 %v1154
    %v1219 = vcvt.s32.f32 %v1155
    %v1220 = vcvt.s32.f32 %v1156
    %v1221 = vcvt.s32.f32 %v1157
    %v1222 = vcvt.s32.f32 %v1158
    %v1223 = vcvt.s32.f32 %v1159
    %v1224 = vcvt.s32.f32 %v1160
    %v1225 = vcvt.s32.f32 %v1161
    %v1226 = vcvt.s32.f32 %v1162
    %v1227 = vcvt.s32.f32 %v1163
    %v1228 = vcvt.s32.f32 %v1164
    %v1229 = vcvt.s32.f32 %v1165
    %v1230 = vcvt.s32.f32 %v1166
    %v1231 = vcvt.s32.f32 %v1167
    %v1232 = vcvt.s32.f32 %v1168
    %v1233 = vcvt.s32.f32 %v1169
    %v1234 = vcvt.s32.f32 %v1170
    %v1235 = vcvt.s32.f32 %v1171
    %v1236 = vcvt.s32.f32 %v1172
    %v1237 = vcvt.s32.f32 %v1173
    %v1238 = vcvt.s32.f32 %v1174
    %v1239 = vcvt.s32.f32 %v1175
    %v1240 = vcvt.s32.f32 %v1176
    %v1241 = vcvt.s32.f32 %v1177
    %v1242 = vcvt.s32.f32 %v1178
    %v1243 = vcvt.s32.f32 %v1179
    %v1244 = vcvt.s32.f32 %v1180
    %v1245 = vcvt.s32.f32 %v1181
    %v1246 = vcvt.s32.f32 %v1182
    %v1247 = vcvt.s32.f32 %v1183
    %v1248 = vcvt.s32.f32 %v1184
    %v1249 = vcvt.s32.f32 %v1185
    %v1250 = vcvt.s32.f32 %v1186
    %v1251 = vcvt.s32.f32 %v1187
    %v1252 = vcvt.s32.f32 %v1188
    %v1253 = vcvt.s32.f32 %v1189
    %v1254 = vcvt.s32.f32 %v1190
    %v1255 = vcvt.s32.f32 %v1191
    %v1256 = vcvt.s32.f32 %v1192
    %v1257 = vcvt.s32.f32 %v1193
    %v1258 = vcvt.s32.f32 %v1194
    %v1259 = vcvt.s32.f32 %v1195
    %v1260 = vcvt.s32.f32 %v1196
    %v1261 = vcvt.s32.f32 %v1197
    %v1262 = vcvt.s32.f32 %v1198
    %v1263 = vcvt.s32.f32 %v1199
    %v1264 = vcvt.s32.f32 %v1200
    %v1265 = vcvt.s32.f32 %v1201
    %v1266 = vcvt.s32.f32 %v1202
    %v1267 = vcvt.s32.f32 %v1203
    %v1268 = vcvt.s32.f32 %v1204
    %v1269 = vcvt.s32.f32 %v1205
    %v1270 = vcvt.s32.f32 %v1206
    %v1271 = vcvt.s32.f32 %v1207
    %v1272 = vlaneseq
    %v1273 = vshrl.u32 %v1272, 7
    %v1274 = vsub.s32 1, %v1273
    %v1275 = vrot.slane %v190, %v1274
    %v1276 = vlaneseq
    %v1277 = vshrl.u32 %v1276, 7
    %v1278 = vsub.s32 3, %v1277
    %v1279 = vrot.slane %v190, %v1278
    %v1280 = vlaneseq
    %v1281 = vshrl.u32 %v1280, 7
    %v1282 = vsub.s32 5, %v1281
    %v1283 = vrot.slane %v190, %v1282
    %v1284 = vlaneseq
    %v1285 = vshrl.u32 %v1284, 7
    %v1286 = vsub.s32 7, %v1285
    %v1287 = vrot.slane %v190, %v1286
    %v1292 = vlaneseq
    %v1293 = vshrl.u32 %v1292, 7
    %v1294 = vsub.s32 1, %v1293
    %v1295 = vrot.slane %v1275, %v1294
    %v1296 = vlaneseq
    %v1297 = vshrl.u32 %v1296, 7
    %v1298 = vsub.s32 1, %v1297
    %v1299 = vrot.slane %v1279, %v1298
    %v1300 = vlaneseq
    %v1301 = vshrl.u32 %v1300, 7
    %v1302 = vsub.s32 1, %v1301
    %v1303 = vrot.slane %v1283, %v1302
    %v1304 = vlaneseq
    %v1305 = vshrl.u32 %v1304, 7
    %v1306 = vsub.s32 1, %v1305
    %v1307 = vrot.slane %v1287, %v1306
    %v1308 = vmul.f32 %v1208, %v1295
    %v1309 = vmul.f32 %v1209, %v1299
    %v1310 = vmul.f32 %v1210, %v1303
    %v1311 = vmul.f32 %v1211, %v1307
    %v1312 = vmul.f32 %v1212, %v1295
    %v1313 = vmul.f32 %v1213, %v1299
    %v1314 = vmul.f32 %v1214, %v1303
    %v1315 = vmul.f32 %v1215, %v1307
    %v1316 = vmul.f32 %v1216, %v1295
    %v1317 = vmul.f32 %v1217, %v1299
    %v1318 = vmul.f32 %v1218, %v1303
    %v1319 = vmul.f32 %v1219, %v1307
    %v1320 = vmul.f32 %v1220, %v1295
    %v1321 = vmul.f32 %v1221, %v1299
    %v1322 = vmul.f32 %v1222, %v1303
    %v1323 = vmul.f32 %v1223, %v1307
    %v1324 = vmul.f32 %v1224, %v1295
    %v1325 = vmul.f32 %v1225, %v1299
    %v1326 = vmul.f32 %v1226, %v1303
    %v1327 = vmul.f32 %v1227, %v1307
    %v1328 = vmul.f32 %v1228, %v1295
    %v1329 = vmul.f32 %v1229, %v1299
    %v1330 = vmul.f32 %v1230, %v1303
    %v1331 = vmul.f32 %v1231, %v1307
    %v1332 = vmul.f32 %v1232, %v1295
    %v1333 = vmul.f32 %v1233, %v1299
    %v1334 = vmul.f32 %v1234, %v1303
    %v1335 = vmul.f32 %v1235, %v1307
    %v1336 = vmul.f32 %v1236, %v1295
    %v1337 = vmul.f32 %v1237, %v1299
    %v1338 = vmul.f32 %v1238, %v1303
    %v1339 = vmul.f32 %v1239, %v1307
    %v1340 = vmul.f32 %v1240, %v1295
    %v1341 = vmul.f32 %v1241, %v1299
    %v1342 = vmul.f32 %v1242, %v1303
    %v1343 = vmul.f32 %v1243, %v1307
    %v1344 = vmul.f32 %v1244, %v1295
    %v1345 = vmul.f32 %v1245, %v1299
    %v1346 = vmul.f32 %v1246, %v1303
    %v1347 = vmul.f32 %v1247, %v1307
    %v1348 = vmul.f32 %v1248, %v1295
    %v1349 = vmul.f32 %v1249, %v1299
    %v1350 = vmul.f32 %v1250, %v1303
    %v1351 = vmul.f32 %v1251, %v1307
    %v1352 = vmul.f32 %v1252, %v1295
    %v1353 = vmul.f32 %v1253, %v1299
    %v1354 = vmul.f32 %v1254, %v1303
    %v1355 = vmul.f32 %v1255, %v1307
    %v1356 = vmul.f32 %v1256, %v1295
    %v1357 = vmul.f32 %v1257, %v1299
    %v1358 = vmul.f32 %v1258, %v1303
    %v1359 = vmul.f32 %v1259, %v1307
    %v1360 = vmul.f32 %v1260, %v1295
    %v1361 = vmul.f32 %v1261, %v1299
    %v1362 = vmul.f32 %v1262, %v1303
    %v1363 = vmul.f32 %v1263, %v1307
    %v1364 = vmul.f32 %v1264, %v1295
    %v1365 = vmul.f32 %v1265, %v1299
    %v1366 = vmul.f32 %v1266, %v1303
    %v1367 = vmul.f32 %v1267, %v1307
    %v1368 = vmul.f32 %v1268, %v1295
    %v1369 = vmul.f32 %v1269, %v1299
    %v1370 = vmul.f32 %v1270, %v1303
    %v1371 = vmul.f32 %v1271, %v1307
    %v1372 = vlaneseq
    %v1373 = vshrl.u32 %v1372, 7
    %v1374 = vsub.s32 1, %v1373
    %v1375 = vrot.slane %v191, %v1374
    %v1376 = vlaneseq
    %v1377 = vshrl.u32 %v1376, 7
    %v1378 = vsub.s32 3, %v1377
    %v1379 = vrot.slane %v191, %v1378
    %v1380 = vlaneseq
    %v1381 = vshrl.u32 %v1380, 7
    %v1382 = vsub.s32 5, %v1381
    %v1383 = vrot.slane %v191, %v1382
    %v1384 = vlaneseq
    %v1385 = vshrl.u32 %v1384, 7
    %v1386 = vsub.s32 7, %v1385
    %v1387 = vrot.slane %v191, %v1386
    %v1392 = vlaneseq
    %v1393 = vshrl.u32 %v1392, 7
    %v1394 = vsub.s32 1, %v1393
    %v1395 = vrot.slane %v1375, %v1394
    %v1396 = vlaneseq
    %v1397 = vshrl.u32 %v1396, 7
    %v1398 = vsub.s32 1, %v1397
    %v1399 = vrot.slane %v1379, %v1398
    %v1400 = vlaneseq
    %v1401 = vshrl.u32 %v1400, 7
    %v1402 = vsub.s32 1, %v1401
    %v1403 = vrot.slane %v1383, %v1402
    %v1404 = vlaneseq
    %v1405 = vshrl.u32 %v1404, 7
    %v1406 = vsub.s32 1, %v1405
    %v1407 = vrot.slane %v1387, %v1406
    %v1408 = vadd.f32 %v1308, %v1395
    %v1409 = vadd.f32 %v1309, %v1399
    %v1410 = vadd.f32 %v1310, %v1403
    %v1411 = vadd.f32 %v1311, %v1407
    %v1412 = vadd.f32 %v1312, %v1395
    %v1413 = vadd.f32 %v1313, %v1399
    %v1414 = vadd.f32 %v1314, %v1403
    %v1415 = vadd.f32 %v1315, %v1407
    %v1416 = vadd.f32 %v1316, %v1395
    %v1417 = vadd.f32 %v1317, %v1399
    %v1418 = vadd.f32 %v1318, %v1403
    %v1419 = vadd.f32 %v1319, %v1407
    %v1420 = vadd.f32 %v1320, %v1395
    %v1421 = vadd.f32 %v1321, %v1399
    %v1422 = vadd.f32 %v1322, %v1403
    %v1423 = vadd.f32 %v1323, %v1407
    %v1424 = vadd.f32 %v1324, %v1395
    %v1425 = vadd.f32 %v1325, %v1399
    %v1426 = vadd.f32 %v1326, %v1403
    %v1427 = vadd.f32 %v1327, %v1407
    %v1428 = vadd.f32 %v1328, %v1395
    %v1429 = vadd.f32 %v1329, %v1399
    %v1430 = vadd.f32 %v1330, %v1403
    %v1431 = vadd.f32 %v1331, %v1407
    %v1432 = vadd.f32 %v1332, %v1395
    %v1433 = vadd.f32 %v1333, %v1399
    %v1434 = vadd.f32 %v1334, %v1403
    %v1435 = vadd.f32 %v1335, %v1407
    %v1436 = vadd.f32 %v1336, %v1395
    %v1437 = vadd.f32 %v1337, %v1399
    %v1438 = vadd.f32 %v1338, %v1403
    %v1439 = vadd.f32 %v1339, %v1407
    %v1440 = vadd.f32 %v1340, %v1395
    %v1441 = vadd.f32 %v1341, %v1399
    %v1442 = vadd.f32 %v1342, %v1403
    %v1443 = vadd.f32 %v1343, %v1407
    %v1444 = vadd.f32 %v1344, %v1395
    %v1445 = vadd.f32 %v1345, %v1399
    %v1446 = vadd.f32 %v1346, %v1403
    %v1447 = vadd.f32 %v1347, %v1407
    %v1448 = vadd.f32 %v1348, %v1395
    %v1449 = vadd.f32 %v1349, %v1399
    %v1450 = vadd.f32 %v1350, %v1403
    %v1451 = vadd.f32 %v1351, %v1407
    %v1452 = vadd.f32 %v1352, %v1395
    %v1453 = vadd.f32 %v1353, %v1399
    %v1454 = vadd.f32 %v1354, %v1403
    %v1455 = vadd.f32 %v1355, %v1407
    %v1456 = vadd.f32 %v1356, %v1395
    %v1457 = vadd.f32 %v1357, %v1399
    %v1458 = vadd.f32 %v1358, %v1403
    %v1459 = vadd.f32 %v1359, %v1407
    %v1460 = vadd.f32 %v1360, %v1395
    %v1461 = vadd.f32 %v1361, %v1399
    %v1462 = vadd.f32 %v1362, %v1403
    %v1463 = vadd.f32 %v1363, %v1407
    %v1464 = vadd.f32 %v1364, %v1395
    %v1465 = vadd.f32 %v1365, %v1399
    %v1466 = vadd.f32 %v1366, %v1403
    %v1467 = vadd.f32 %v1367, %v1407
    %v1468 = vadd.f32 %v1368, %v1395
    %v1469 = vadd.f32 %v1369, %v1399
    %v1470 = vadd.f32 %v1370, %v1403
    %v1471 = vadd.f32 %v1371, %v1407
    %v1472 = vpack.c.bf16 %v1412, %v1408
    %v1473 = vpack.c.bf16 %v1413, %v1409
    %v1474 = vpack.c.bf16 %v1414, %v1410
    %v1475 = vpack.c.bf16 %v1415, %v1411
    %v1476 = vpack.c.bf16 %v1420, %v1416
    %v1477 = vpack.c.bf16 %v1421, %v1417
    %v1478 = vpack.c.bf16 %v1422, %v1418
    %v1479 = vpack.c.bf16 %v1423, %v1419
    %v1480 = vpack.c.bf16 %v1428, %v1424
    %v1481 = vpack.c.bf16 %v1429, %v1425
    %v1482 = vpack.c.bf16 %v1430, %v1426
    %v1483 = vpack.c.bf16 %v1431, %v1427
    %v1484 = vpack.c.bf16 %v1436, %v1432
    %v1485 = vpack.c.bf16 %v1437, %v1433
    %v1486 = vpack.c.bf16 %v1438, %v1434
    %v1487 = vpack.c.bf16 %v1439, %v1435
    %v1488 = vpack.c.bf16 %v1444, %v1440
    %v1489 = vpack.c.bf16 %v1445, %v1441
    %v1490 = vpack.c.bf16 %v1446, %v1442
    %v1491 = vpack.c.bf16 %v1447, %v1443
    %v1492 = vpack.c.bf16 %v1452, %v1448
    %v1493 = vpack.c.bf16 %v1453, %v1449
    %v1494 = vpack.c.bf16 %v1454, %v1450
    %v1495 = vpack.c.bf16 %v1455, %v1451
    %v1496 = vpack.c.bf16 %v1460, %v1456
    %v1497 = vpack.c.bf16 %v1461, %v1457
    %v1498 = vpack.c.bf16 %v1462, %v1458
    %v1499 = vpack.c.bf16 %v1463, %v1459
    %v1500 = vpack.c.bf16 %v1468, %v1464
    %v1501 = vpack.c.bf16 %v1469, %v1465
    %v1502 = vpack.c.bf16 %v1470, %v1466
    %v1503 = vpack.c.bf16 %v1471, %v1467
    %v1504 = vunpack.c.0.s8 %v174
    %v1505 = vunpack.c.0.s8 %v175
    %v1506 = vunpack.c.0.s8 %v176
    %v1507 = vunpack.c.0.s8 %v177
    %v1508 = vunpack.c.1.s8 %v174
    %v1509 = vunpack.c.1.s8 %v175
    %v1510 = vunpack.c.1.s8 %v176
    %v1511 = vunpack.c.1.s8 %v177
    %v1512 = vunpack.c.2.s8 %v174
    %v1513 = vunpack.c.2.s8 %v175
    %v1514 = vunpack.c.2.s8 %v176
    %v1515 = vunpack.c.2.s8 %v177
    %v1516 = vunpack.c.3.s8 %v174
    %v1517 = vunpack.c.3.s8 %v175
    %v1518 = vunpack.c.3.s8 %v176
    %v1519 = vunpack.c.3.s8 %v177
    %v1520 = vunpack.c.0.s8 %v178
    %v1521 = vunpack.c.0.s8 %v179
    %v1522 = vunpack.c.0.s8 %v180
    %v1523 = vunpack.c.0.s8 %v181
    %v1524 = vunpack.c.1.s8 %v178
    %v1525 = vunpack.c.1.s8 %v179
    %v1526 = vunpack.c.1.s8 %v180
    %v1527 = vunpack.c.1.s8 %v181
    %v1528 = vunpack.c.2.s8 %v178
    %v1529 = vunpack.c.2.s8 %v179
    %v1530 = vunpack.c.2.s8 %v180
    %v1531 = vunpack.c.2.s8 %v181
    %v1532 = vunpack.c.3.s8 %v178
    %v1533 = vunpack.c.3.s8 %v179
    %v1534 = vunpack.c.3.s8 %v180
    %v1535 = vunpack.c.3.s8 %v181
    %v1536 = vunpack.c.0.s8 %v182
    %v1537 = vunpack.c.0.s8 %v183
    %v1538 = vunpack.c.0.s8 %v184
    %v1539 = vunpack.c.0.s8 %v185
    %v1540 = vunpack.c.1.s8 %v182
    %v1541 = vunpack.c.1.s8 %v183
    %v1542 = vunpack.c.1.s8 %v184
    %v1543 = vunpack.c.1.s8 %v185
    %v1544 = vunpack.c.2.s8 %v182
    %v1545 = vunpack.c.2.s8 %v183
    %v1546 = vunpack.c.2.s8 %v184
    %v1547 = vunpack.c.2.s8 %v185
    %v1548 = vunpack.c.3.s8 %v182
    %v1549 = vunpack.c.3.s8 %v183
    %v1550 = vunpack.c.3.s8 %v184
    %v1551 = vunpack.c.3.s8 %v185
    %v1552 = vunpack.c.0.s8 %v186
    %v1553 = vunpack.c.0.s8 %v187
    %v1554 = vunpack.c.0.s8 %v188
    %v1555 = vunpack.c.0.s8 %v189
    %v1556 = vunpack.c.1.s8 %v186
    %v1557 = vunpack.c.1.s8 %v187
    %v1558 = vunpack.c.1.s8 %v188
    %v1559 = vunpack.c.1.s8 %v189
    %v1560 = vunpack.c.2.s8 %v186
    %v1561 = vunpack.c.2.s8 %v187
    %v1562 = vunpack.c.2.s8 %v188
    %v1563 = vunpack.c.2.s8 %v189
    %v1564 = vunpack.c.3.s8 %v186
    %v1565 = vunpack.c.3.s8 %v187
    %v1566 = vunpack.c.3.s8 %v188
    %v1567 = vunpack.c.3.s8 %v189
    %v1568 = vcvt.s32.f32 %v1504
    %v1569 = vcvt.s32.f32 %v1505
    %v1570 = vcvt.s32.f32 %v1506
    %v1571 = vcvt.s32.f32 %v1507
    %v1572 = vcvt.s32.f32 %v1508
    %v1573 = vcvt.s32.f32 %v1509
    %v1574 = vcvt.s32.f32 %v1510
    %v1575 = vcvt.s32.f32 %v1511
    %v1576 = vcvt.s32.f32 %v1512
    %v1577 = vcvt.s32.f32 %v1513
    %v1578 = vcvt.s32.f32 %v1514
    %v1579 = vcvt.s32.f32 %v1515
    %v1580 = vcvt.s32.f32 %v1516
    %v1581 = vcvt.s32.f32 %v1517
    %v1582 = vcvt.s32.f32 %v1518
    %v1583 = vcvt.s32.f32 %v1519
    %v1584 = vcvt.s32.f32 %v1520
    %v1585 = vcvt.s32.f32 %v1521
    %v1586 = vcvt.s32.f32 %v1522
    %v1587 = vcvt.s32.f32 %v1523
    %v1588 = vcvt.s32.f32 %v1524
    %v1589 = vcvt.s32.f32 %v1525
    %v1590 = vcvt.s32.f32 %v1526
    %v1591 = vcvt.s32.f32 %v1527
    %v1592 = vcvt.s32.f32 %v1528
    %v1593 = vcvt.s32.f32 %v1529
    %v1594 = vcvt.s32.f32 %v1530
    %v1595 = vcvt.s32.f32 %v1531
    %v1596 = vcvt.s32.f32 %v1532
    %v1597 = vcvt.s32.f32 %v1533
    %v1598 = vcvt.s32.f32 %v1534
    %v1599 = vcvt.s32.f32 %v1535
    %v1600 = vcvt.s32.f32 %v1536
    %v1601 = vcvt.s32.f32 %v1537
    %v1602 = vcvt.s32.f32 %v1538
    %v1603 = vcvt.s32.f32 %v1539
    %v1604 = vcvt.s32.f32 %v1540
    %v1605 = vcvt.s32.f32 %v1541
    %v1606 = vcvt.s32.f32 %v1542
    %v1607 = vcvt.s32.f32 %v1543
    %v1608 = vcvt.s32.f32 %v1544
    %v1609 = vcvt.s32.f32 %v1545
    %v1610 = vcvt.s32.f32 %v1546
    %v1611 = vcvt.s32.f32 %v1547
    %v1612 = vcvt.s32.f32 %v1548
    %v1613 = vcvt.s32.f32 %v1549
    %v1614 = vcvt.s32.f32 %v1550
    %v1615 = vcvt.s32.f32 %v1551
    %v1616 = vcvt.s32.f32 %v1552
    %v1617 = vcvt.s32.f32 %v1553
    %v1618 = vcvt.s32.f32 %v1554
    %v1619 = vcvt.s32.f32 %v1555
    %v1620 = vcvt.s32.f32 %v1556
    %v1621 = vcvt.s32.f32 %v1557
    %v1622 = vcvt.s32.f32 %v1558
    %v1623 = vcvt.s32.f32 %v1559
    %v1624 = vcvt.s32.f32 %v1560
    %v1625 = vcvt.s32.f32 %v1561
    %v1626 = vcvt.s32.f32 %v1562
    %v1627 = vcvt.s32.f32 %v1563
    %v1628 = vcvt.s32.f32 %v1564
    %v1629 = vcvt.s32.f32 %v1565
    %v1630 = vcvt.s32.f32 %v1566
    %v1631 = vcvt.s32.f32 %v1567
    %v1632 = vlaneseq
    %v1633 = vshrl.u32 %v1632, 7
    %v1634 = vsub.s32 1, %v1633
    %v1635 = vrot.slane %v192, %v1634
    %v1636 = vlaneseq
    %v1637 = vshrl.u32 %v1636, 7
    %v1638 = vsub.s32 3, %v1637
    %v1639 = vrot.slane %v192, %v1638
    %v1640 = vlaneseq
    %v1641 = vshrl.u32 %v1640, 7
    %v1642 = vsub.s32 5, %v1641
    %v1643 = vrot.slane %v192, %v1642
    %v1644 = vlaneseq
    %v1645 = vshrl.u32 %v1644, 7
    %v1646 = vsub.s32 7, %v1645
    %v1647 = vrot.slane %v192, %v1646
    %v1652 = vlaneseq
    %v1653 = vshrl.u32 %v1652, 7
    %v1654 = vsub.s32 1, %v1653
    %v1655 = vrot.slane %v1635, %v1654
    %v1656 = vlaneseq
    %v1657 = vshrl.u32 %v1656, 7
    %v1658 = vsub.s32 1, %v1657
    %v1659 = vrot.slane %v1639, %v1658
    %v1660 = vlaneseq
    %v1661 = vshrl.u32 %v1660, 7
    %v1662 = vsub.s32 1, %v1661
    %v1663 = vrot.slane %v1643, %v1662
    %v1664 = vlaneseq
    %v1665 = vshrl.u32 %v1664, 7
    %v1666 = vsub.s32 1, %v1665
    %v1667 = vrot.slane %v1647, %v1666
    %v1668 = vmul.f32 %v1568, %v1655
    %v1669 = vmul.f32 %v1569, %v1659
    %v1670 = vmul.f32 %v1570, %v1663
    %v1671 = vmul.f32 %v1571, %v1667
    %v1672 = vmul.f32 %v1572, %v1655
    %v1673 = vmul.f32 %v1573, %v1659
    %v1674 = vmul.f32 %v1574, %v1663
    %v1675 = vmul.f32 %v1575, %v1667
    %v1676 = vmul.f32 %v1576, %v1655
    %v1677 = vmul.f32 %v1577, %v1659
    %v1678 = vmul.f32 %v1578, %v1663
    %v1679 = vmul.f32 %v1579, %v1667
    %v1680 = vmul.f32 %v1580, %v1655
    %v1681 = vmul.f32 %v1581, %v1659
    %v1682 = vmul.f32 %v1582, %v1663
    %v1683 = vmul.f32 %v1583, %v1667
    %v1684 = vmul.f32 %v1584, %v1655
    %v1685 = vmul.f32 %v1585, %v1659
    %v1686 = vmul.f32 %v1586, %v1663
    %v1687 = vmul.f32 %v1587, %v1667
    %v1688 = vmul.f32 %v1588, %v1655
    %v1689 = vmul.f32 %v1589, %v1659
    %v1690 = vmul.f32 %v1590, %v1663
    %v1691 = vmul.f32 %v1591, %v1667
    %v1692 = vmul.f32 %v1592, %v1655
    %v1693 = vmul.f32 %v1593, %v1659
    %v1694 = vmul.f32 %v1594, %v1663
    %v1695 = vmul.f32 %v1595, %v1667
    %v1696 = vmul.f32 %v1596, %v1655
    %v1697 = vmul.f32 %v1597, %v1659
    %v1698 = vmul.f32 %v1598, %v1663
    %v1699 = vmul.f32 %v1599, %v1667
    %v1700 = vmul.f32 %v1600, %v1655
    %v1701 = vmul.f32 %v1601, %v1659
    %v1702 = vmul.f32 %v1602, %v1663
    %v1703 = vmul.f32 %v1603, %v1667
    %v1704 = vmul.f32 %v1604, %v1655
    %v1705 = vmul.f32 %v1605, %v1659
    %v1706 = vmul.f32 %v1606, %v1663
    %v1707 = vmul.f32 %v1607, %v1667
    %v1708 = vmul.f32 %v1608, %v1655
    %v1709 = vmul.f32 %v1609, %v1659
    %v1710 = vmul.f32 %v1610, %v1663
    %v1711 = vmul.f32 %v1611, %v1667
    %v1712 = vmul.f32 %v1612, %v1655
    %v1713 = vmul.f32 %v1613, %v1659
    %v1714 = vmul.f32 %v1614, %v1663
    %v1715 = vmul.f32 %v1615, %v1667
    %v1716 = vmul.f32 %v1616, %v1655
    %v1717 = vmul.f32 %v1617, %v1659
    %v1718 = vmul.f32 %v1618, %v1663
    %v1719 = vmul.f32 %v1619, %v1667
    %v1720 = vmul.f32 %v1620, %v1655
    %v1721 = vmul.f32 %v1621, %v1659
    %v1722 = vmul.f32 %v1622, %v1663
    %v1723 = vmul.f32 %v1623, %v1667
    %v1724 = vmul.f32 %v1624, %v1655
    %v1725 = vmul.f32 %v1625, %v1659
    %v1726 = vmul.f32 %v1626, %v1663
    %v1727 = vmul.f32 %v1627, %v1667
    %v1728 = vmul.f32 %v1628, %v1655
    %v1729 = vmul.f32 %v1629, %v1659
    %v1730 = vmul.f32 %v1630, %v1663
    %v1731 = vmul.f32 %v1631, %v1667
    %v1732 = vlaneseq
    %v1733 = vshrl.u32 %v1732, 7
    %v1734 = vsub.s32 1, %v1733
    %v1735 = vrot.slane %v193, %v1734
    %v1736 = vlaneseq
    %v1737 = vshrl.u32 %v1736, 7
    %v1738 = vsub.s32 3, %v1737
    %v1739 = vrot.slane %v193, %v1738
    %v1740 = vlaneseq
    %v1741 = vshrl.u32 %v1740, 7
    %v1742 = vsub.s32 5, %v1741
    %v1743 = vrot.slane %v193, %v1742
    %v1744 = vlaneseq
    %v1745 = vshrl.u32 %v1744, 7
    %v1746 = vsub.s32 7, %v1745
    %v1747 = vrot.slane %v193, %v1746
    %v1752 = vlaneseq
    %v1753 = vshrl.u32 %v1752, 7
    %v1754 = vsub.s32 1, %v1753
    %v1755 = vrot.slane %v1735, %v1754
    %v1756 = vlaneseq
    %v1757 = vshrl.u32 %v1756, 7
    %v1758 = vsub.s32 1, %v1757
    %v1759 = vrot.slane %v1739, %v1758
    %v1760 = vlaneseq
    %v1761 = vshrl.u32 %v1760, 7
    %v1762 = vsub.s32 1, %v1761
    %v1763 = vrot.slane %v1743, %v1762
    %v1764 = vlaneseq
    %v1765 = vshrl.u32 %v1764, 7
    %v1766 = vsub.s32 1, %v1765
    %v1767 = vrot.slane %v1747, %v1766
    %v1768 = vadd.f32 %v1668, %v1755
    %v1769 = vadd.f32 %v1669, %v1759
    %v1770 = vadd.f32 %v1670, %v1763
    %v1771 = vadd.f32 %v1671, %v1767
    %v1772 = vadd.f32 %v1672, %v1755
    %v1773 = vadd.f32 %v1673, %v1759
    %v1774 = vadd.f32 %v1674, %v1763
    %v1775 = vadd.f32 %v1675, %v1767
    %v1776 = vadd.f32 %v1676, %v1755
    %v1777 = vadd.f32 %v1677, %v1759
    %v1778 = vadd.f32 %v1678, %v1763
    %v1779 = vadd.f32 %v1679, %v1767
    %v1780 = vadd.f32 %v1680, %v1755
    %v1781 = vadd.f32 %v1681, %v1759
    %v1782 = vadd.f32 %v1682, %v1763
    %v1783 = vadd.f32 %v1683, %v1767
    %v1784 = vadd.f32 %v1684, %v1755
    %v1785 = vadd.f32 %v1685, %v1759
    %v1786 = vadd.f32 %v1686, %v1763
    %v1787 = vadd.f32 %v1687, %v1767
    %v1788 = vadd.f32 %v1688, %v1755
    %v1789 = vadd.f32 %v1689, %v1759
    %v1790 = vadd.f32 %v1690, %v1763
    %v1791 = vadd.f32 %v1691, %v1767
    %v1792 = vadd.f32 %v1692, %v1755
    %v1793 = vadd.f32 %v1693, %v1759
    %v1794 = vadd.f32 %v1694, %v1763
    %v1795 = vadd.f32 %v1695, %v1767
    %v1796 = vadd.f32 %v1696, %v1755
    %v1797 = vadd.f32 %v1697, %v1759
    %v1798 = vadd.f32 %v1698, %v1763
    %v1799 = vadd.f32 %v1699, %v1767
    %v1800 = vadd.f32 %v1700, %v1755
    %v1801 = vadd.f32 %v1701, %v1759
    %v1802 = vadd.f32 %v1702, %v1763
    %v1803 = vadd.f32 %v1703, %v1767
    %v1804 = vadd.f32 %v1704, %v1755
    %v1805 = vadd.f32 %v1705, %v1759
    %v1806 = vadd.f32 %v1706, %v1763
    %v1807 = vadd.f32 %v1707, %v1767
    %v1808 = vadd.f32 %v1708, %v1755
    %v1809 = vadd.f32 %v1709, %v1759
    %v1810 = vadd.f32 %v1710, %v1763
    %v1811 = vadd.f32 %v1711, %v1767
    %v1812 = vadd.f32 %v1712, %v1755
    %v1813 = vadd.f32 %v1713, %v1759
    %v1814 = vadd.f32 %v1714, %v1763
    %v1815 = vadd.f32 %v1715, %v1767
    %v1816 = vadd.f32 %v1716, %v1755
    %v1817 = vadd.f32 %v1717, %v1759
    %v1818 = vadd.f32 %v1718, %v1763
    %v1819 = vadd.f32 %v1719, %v1767
    %v1820 = vadd.f32 %v1720, %v1755
    %v1821 = vadd.f32 %v1721, %v1759
    %v1822 = vadd.f32 %v1722, %v1763
    %v1823 = vadd.f32 %v1723, %v1767
    %v1824 = vadd.f32 %v1724, %v1755
    %v1825 = vadd.f32 %v1725, %v1759
    %v1826 = vadd.f32 %v1726, %v1763
    %v1827 = vadd.f32 %v1727, %v1767
    %v1828 = vadd.f32 %v1728, %v1755
    %v1829 = vadd.f32 %v1729, %v1759
    %v1830 = vadd.f32 %v1730, %v1763
    %v1831 = vadd.f32 %v1731, %v1767
    %v1832 = vpack.c.bf16 %v1772, %v1768
    %v1833 = vpack.c.bf16 %v1773, %v1769
    %v1834 = vpack.c.bf16 %v1774, %v1770
    %v1835 = vpack.c.bf16 %v1775, %v1771
    %v1836 = vpack.c.bf16 %v1780, %v1776
    %v1837 = vpack.c.bf16 %v1781, %v1777
    %v1838 = vpack.c.bf16 %v1782, %v1778
    %v1839 = vpack.c.bf16 %v1783, %v1779
    %v1840 = vpack.c.bf16 %v1788, %v1784
    %v1841 = vpack.c.bf16 %v1789, %v1785
    %v1842 = vpack.c.bf16 %v1790, %v1786
    %v1843 = vpack.c.bf16 %v1791, %v1787
    %v1844 = vpack.c.bf16 %v1796, %v1792
    %v1845 = vpack.c.bf16 %v1797, %v1793
    %v1846 = vpack.c.bf16 %v1798, %v1794
    %v1847 = vpack.c.bf16 %v1799, %v1795
    %v1848 = vpack.c.bf16 %v1804, %v1800
    %v1849 = vpack.c.bf16 %v1805, %v1801
    %v1850 = vpack.c.bf16 %v1806, %v1802
    %v1851 = vpack.c.bf16 %v1807, %v1803
    %v1852 = vpack.c.bf16 %v1812, %v1808
    %v1853 = vpack.c.bf16 %v1813, %v1809
    %v1854 = vpack.c.bf16 %v1814, %v1810
    %v1855 = vpack.c.bf16 %v1815, %v1811
    %v1856 = vpack.c.bf16 %v1820, %v1816
    %v1857 = vpack.c.bf16 %v1821, %v1817
    %v1858 = vpack.c.bf16 %v1822, %v1818
    %v1859 = vpack.c.bf16 %v1823, %v1819
    %v1860 = vpack.c.bf16 %v1828, %v1824
    %v1861 = vpack.c.bf16 %v1829, %v1825
    %v1862 = vpack.c.bf16 %v1830, %v1826
    %v1863 = vpack.c.bf16 %v1831, %v1827
    %v1864 = vld [vmem:[#allocation2] sm:$0xff]
    %v1865 = vld [vmem:[#allocation2 + $0x8] sm:$0xff]
    %v1866 = vld [vmem:[#allocation2 + $0x10] sm:$0xff]
    %v1867 = vld [vmem:[#allocation2 + $0x18] sm:$0xff]
    %v1868 = vld [vmem:[#allocation2 + $0x20] sm:$0xff]
    %v1869 = vld [vmem:[#allocation2 + $0x28] sm:$0xff]
    %v1870 = vld [vmem:[#allocation2 + $0x30] sm:$0xff]
    %v1871 = vld [vmem:[#allocation2 + $0x38] sm:$0xff]
    %v1872 = vunpack.c.h.b16 %v124
    %v1873 = vunpack.c.h.b16 %v125
    %v1874 = vpack.c.b16 %v1873, %v1872
    %1876 = vmatprep.subr.bf16.mxu0 %v1501
    %1877 = vmatpush1.bf16.msra.mxu0 %v1500
    %1878 = vmatprep.subr.bf16.mxu0 %v1497
    %1879 = vmatpush1.bf16.msra.mxu0 %v1496
    %1880 = vmatprep.subr.bf16.mxu0 %v1493
    %1881 = vmatpush1.bf16.msra.mxu0 %v1492
    %1882 = vmatprep.subr.bf16.mxu0 %v1489
    %1883 = vmatpush1.bf16.msra.mxu0 %v1488
    %1884 = vmatprep.subr.bf16.mxu0 %v1485
    %1885 = vmatpush1.bf16.msra.mxu0 %v1484
    %1886 = vmatprep.subr.bf16.mxu0 %v1481
    %1887 = vmatpush1.bf16.msra.mxu0 %v1480
    %1888 = vmatprep.subr.bf16.mxu0 %v1477
    %1889 = vmatpush1.bf16.msra.mxu0 %v1476
    %1890 = vmatprep.subr.bf16.mxu0 %v1473
    %1891 = vmatpush1.bf16.msra.mxu0 %v1472
    %1892 = vmatprep.subr.bf16.mxu0 0
    %1893 = vmatpush2.bf16.msra.mxu0 0
    %1894 = vmatprep.subr.bf16.mxu0 0
    %1895 = vmatpush2.bf16.msra.mxu0 0
    %1896 = vmatprep.subr.bf16.mxu0 0
    %1897 = vmatpush2.bf16.msra.mxu0 0
    %1898 = vmatprep.subr.bf16.mxu0 0
    %1899 = vmatpush2.bf16.msra.mxu0 0
    %1900 = vmatprep.subr.bf16.mxu0 0
    %1901 = vmatpush2.bf16.msra.mxu0 0
    %1902 = vmatprep.subr.bf16.mxu0 0
    %1903 = vmatpush2.bf16.msra.mxu0 0
    %1904 = vmatprep.subr.bf16.mxu0 0
    %1905 = vmatpush2.bf16.msra.mxu0 0
    %1906 = vmatprep.subr.bf16.mxu0 0
    %1907 = vmatpush2.bf16.msra.mxu0 0
    %1908 = vmatprep.mubr.bf16.mxu0 0
    %1909 = vmatmul.mubr.bf16.gmra.mxu0 %v1874
    %v1910 = vpop.f32.mrf.mxu0
    %v1911 = vadd.f32 0.0, %v1910
    %v1912 = vpop.f32.mrf.mxu0
    %v1913 = vadd.f32 0.0, %v1912
    %v1914 = vpop.f32.mrf.mxu0
    %v1915 = vadd.f32 0.0, %v1914
    %v1916 = vpop.f32.mrf.mxu0
    %v1917 = vadd.f32 0.0, %v1916
    %1918 = vdwg.mxu0
    %1919 = vmatprep.subr.bf16.mxu0 %v1503
    %1920 = vmatpush1.bf16.msra.mxu0 %v1502
    %1921 = vmatprep.subr.bf16.mxu0 %v1499
    %1922 = vmatpush1.bf16.msra.mxu0 %v1498
    %1923 = vmatprep.subr.bf16.mxu0 %v1495
    %1924 = vmatpush1.bf16.msra.mxu0 %v1494
    %1925 = vmatprep.subr.bf16.mxu0 %v1491
    %1926 = vmatpush1.bf16.msra.mxu0 %v1490
    %1927 = vmatprep.subr.bf16.mxu0 %v1487
    %1928 = vmatpush1.bf16.msra.mxu0 %v1486
    %1929 = vmatprep.subr.bf16.mxu0 %v1483
    %1930 = vmatpush1.bf16.msra.mxu0 %v1482
    %1931 = vmatprep.subr.bf16.mxu0 %v1479
    %1932 = vmatpush1.bf16.msra.mxu0 %v1478
    %1933 = vmatprep.subr.bf16.mxu0 %v1475
    %1934 = vmatpush1.bf16.msra.mxu0 %v1474
    %1935 = vmatprep.subr.bf16.mxu0 0
    %1936 = vmatpush2.bf16.msra.mxu0 0
    %1937 = vmatprep.subr.bf16.mxu0 0
    %1938 = vmatpush2.bf16.msra.mxu0 0
    %1939 = vmatprep.subr.bf16.mxu0 0
    %1940 = vmatpush2.bf16.msra.mxu0 0
    %1941 = vmatprep.subr.bf16.mxu0 0
    %1942 = vmatpush2.bf16.msra.mxu0 0
    %1943 = vmatprep.subr.bf16.mxu0 0
    %1944 = vmatpush2.bf16.msra.mxu0 0
    %1945 = vmatprep.subr.bf16.mxu0 0
    %1946 = vmatpush2.bf16.msra.mxu0 0
    %1947 = vmatprep.subr.bf16.mxu0 0
    %1948 = vmatpush2.bf16.msra.mxu0 0
    %1949 = vmatprep.subr.bf16.mxu0 0
    %1950 = vmatpush2.bf16.msra.mxu0 0
    %1951 = vmatprep.mubr.bf16.mxu0 0
    %1952 = vmatmul.mubr.bf16.gmra.mxu0 %v1874
    %v1953 = vpop.f32.mrf.mxu0
    %v1954 = vadd.f32 0.0, %v1953
    %v1955 = vpop.f32.mrf.mxu0
    %v1956 = vadd.f32 0.0, %v1955
    %v1957 = vpop.f32.mrf.mxu0
    %v1958 = vadd.f32 0.0, %v1957
    %v1959 = vpop.f32.mrf.mxu0
    %v1960 = vadd.f32 0.0, %v1959
    %1961 = vdwg.mxu0
    %v1962 = vadd.f32 %v1864, %v1911
    %v1963 = vadd.f32 %v1865, %v1913
    %v1964 = vadd.f32 %v1866, %v1954
    %v1965 = vadd.f32 %v1867, %v1956
    %v1966 = vadd.f32 %v1868, %v1915
    %v1967 = vadd.f32 %v1869, %v1917
    %v1968 = vadd.f32 %v1870, %v1958
    %v1969 = vadd.f32 %v1871, %v1960
    %1970 = vst [vmem:[#allocation2] sm:$0xff] %v1962
    %1971 = vst [vmem:[#allocation2 + $0x8] sm:$0xff] %v1963
    %1972 = vst [vmem:[#allocation2 + $0x10] sm:$0xff] %v1964
    %1973 = vst [vmem:[#allocation2 + $0x18] sm:$0xff] %v1965
    %1974 = vst [vmem:[#allocation2 + $0x20] sm:$0xff] %v1966
    %1975 = vst [vmem:[#allocation2 + $0x28] sm:$0xff] %v1967
    %1976 = vst [vmem:[#allocation2 + $0x30] sm:$0xff] %v1968
    %1977 = vst [vmem:[#allocation2 + $0x38] sm:$0xff] %v1969
    %v1978 = vld [vmem:[#allocation3] sm:$0xff]
    %v1979 = vld [vmem:[#allocation3 + $0x8] sm:$0xff]
    %v1980 = vld [vmem:[#allocation3 + $0x10] sm:$0xff]
    %v1981 = vld [vmem:[#allocation3 + $0x18] sm:$0xff]
    %v1982 = vld [vmem:[#allocation3 + $0x20] sm:$0xff]
    %v1983 = vld [vmem:[#allocation3 + $0x28] sm:$0xff]
    %v1984 = vld [vmem:[#allocation3 + $0x30] sm:$0xff]
    %v1985 = vld [vmem:[#allocation3 + $0x38] sm:$0xff]
    %1986 = vmatprep.subr.bf16.mxu0 %v1861
    %1987 = vmatpush1.bf16.msra.mxu0 %v1860
    %1988 = vmatprep.subr.bf16.mxu0 %v1857
    %1989 = vmatpush1.bf16.msra.mxu0 %v1856
    %1990 = vmatprep.subr.bf16.mxu0 %v1853
    %1991 = vmatpush1.bf16.msra.mxu0 %v1852
    %1992 = vmatprep.subr.bf16.mxu0 %v1849
    %1993 = vmatpush1.bf16.msra.mxu0 %v1848
    %1994 = vmatprep.subr.bf16.mxu0 %v1845
    %1995 = vmatpush1.bf16.msra.mxu0 %v1844
    %1996 = vmatprep.subr.bf16.mxu0 %v1841
    %1997 = vmatpush1.bf16.msra.mxu0 %v1840
    %1998 = vmatprep.subr.bf16.mxu0 %v1837
    %1999 = vmatpush1.bf16.msra.mxu0 %v1836
    %2000 = vmatprep.subr.bf16.mxu0 %v1833
    %2001 = vmatpush1.bf16.msra.mxu0 %v1832
    %2002 = vmatprep.subr.bf16.mxu0 0
    %2003 = vmatpush2.bf16.msra.mxu0 0
    %2004 = vmatprep.subr.bf16.mxu0 0
    %2005 = vmatpush2.bf16.msra.mxu0 0
    %2006 = vmatprep.subr.bf16.mxu0 0
    %2007 = vmatpush2.bf16.msra.mxu0 0
    %2008 = vmatprep.subr.bf16.mxu0 0
    %2009 = vmatpush2.bf16.msra.mxu0 0
    %2010 = vmatprep.subr.bf16.mxu0 0
    %2011 = vmatpush2.bf16.msra.mxu0 0
    %2012 = vmatprep.subr.bf16.mxu0 0
    %2013 = vmatpush2.bf16.msra.mxu0 0
    %2014 = vmatprep.subr.bf16.mxu0 0
    %2015 = vmatpush2.bf16.msra.mxu0 0
    %2016 = vmatprep.subr.bf16.mxu0 0
    %2017 = vmatpush2.bf16.msra.mxu0 0
    %2018 = vmatprep.mubr.bf16.mxu0 0
    %2019 = vmatmul.mubr.bf16.gmra.mxu0 %v1874
    %v2020 = vpop.f32.mrf.mxu0
    %v2021 = vadd.f32 0.0, %v2020
    %v2022 = vpop.f32.mrf.mxu0
    %v2023 = vadd.f32 0.0, %v2022
    %v2024 = vpop.f32.mrf.mxu0
    %v2025 = vadd.f32 0.0, %v2024
    %v2026 = vpop.f32.mrf.mxu0
    %v2027 = vadd.f32 0.0, %v2026
    %2028 = vdwg.mxu0
    %2029 = vmatprep.subr.bf16.mxu0 %v1863
    %2030 = vmatpush1.bf16.msra.mxu0 %v1862
    %2031 = vmatprep.subr.bf16.mxu0 %v1859
    %2032 = vmatpush1.bf16.msra.mxu0 %v1858
    %2033 = vmatprep.subr.bf16.mxu0 %v1855
    %2034 = vmatpush1.bf16.msra.mxu0 %v1854
    %2035 = vmatprep.subr.bf16.mxu0 %v1851
    %2036 = vmatpush1.bf16.msra.mxu0 %v1850
    %2037 = vmatprep.subr.bf16.mxu0 %v1847
    %2038 = vmatpush1.bf16.msra.mxu0 %v1846
    %2039 = vmatprep.subr.bf16.mxu0 %v1843
    %2040 = vmatpush1.bf16.msra.mxu0 %v1842
    %2041 = vmatprep.subr.bf16.mxu0 %v1839
    %2042 = vmatpush1.bf16.msra.mxu0 %v1838
    %2043 = vmatprep.subr.bf16.mxu0 %v1835
    %2044 = vmatpush1.bf16.msra.mxu0 %v1834
    %2045 = vmatprep.subr.bf16.mxu0 0
    %2046 = vmatpush2.bf16.msra.mxu0 0
    %2047 = vmatprep.subr.bf16.mxu0 0
    %2048 = vmatpush2.bf16.msra.mxu0 0
    %2049 = vmatprep.subr.bf16.mxu0 0
    %2050 = vmatpush2.bf16.msra.mxu0 0
    %2051 = vmatprep.subr.bf16.mxu0 0
    %2052 = vmatpush2.bf16.msra.mxu0 0
    %2053 = vmatprep.subr.bf16.mxu0 0
    %2054 = vmatpush2.bf16.msra.mxu0 0
    %2055 = vmatprep.subr.bf16.mxu0 0
    %2056 = vmatpush2.bf16.msra.mxu0 0
    %2057 = vmatprep.subr.bf16.mxu0 0
    %2058 = vmatpush2.bf16.msra.mxu0 0
    %2059 = vmatprep.subr.bf16.mxu0 0
    %2060 = vmatpush2.bf16.msra.mxu0 0
    %2061 = vmatprep.mubr.bf16.mxu0 0
    %2062 = vmatmul.mubr.bf16.gmra.mxu0 %v1874
    %v2063 = vpop.f32.mrf.mxu0
    %v2064 = vadd.f32 0.0, %v2063
    %v2065 = vpop.f32.mrf.mxu0
    %v2066 = vadd.f32 0.0, %v2065
    %v2067 = vpop.f32.mrf.mxu0
    %v2068 = vadd.f32 0.0, %v2067
    %v2069 = vpop.f32.mrf.mxu0
    %v2070 = vadd.f32 0.0, %v2069
    %2071 = vdwg.mxu0
    %v2072 = vadd.f32 %v1978, %v2021
    %v2073 = vadd.f32 %v1979, %v2023
    %v2074 = vadd.f32 %v1980, %v2064
    %v2075 = vadd.f32 %v1981, %v2066
    %v2076 = vadd.f32 %v1982, %v2025
    %v2077 = vadd.f32 %v1983, %v2027
    %v2078 = vadd.f32 %v1984, %v2068
    %v2079 = vadd.f32 %v1985, %v2070
    %2080 = vst [vmem:[#allocation3] sm:$0xff] %v2072
    %2081 = vst [vmem:[#allocation3 + $0x8] sm:$0xff] %v2073
    %2082 = vst [vmem:[#allocation3 + $0x10] sm:$0xff] %v2074
    %2083 = vst [vmem:[#allocation3 + $0x18] sm:$0xff] %v2075
    %2084 = vst [vmem:[#allocation3 + $0x20] sm:$0xff] %v2076
    %2085 = vst [vmem:[#allocation3 + $0x28] sm:$0xff] %v2077
    %2086 = vst [vmem:[#allocation3 + $0x30] sm:$0xff] %v2078
    %2087 = vst [vmem:[#allocation3 + $0x38] sm:$0xff] %v2079
    // Predicated region
    $region58: #{tpu_custom_call.1} parent=1 // pred_check
      %p2088 = pneg %p104
    $region59: #{tpu_custom_call.1} parent=1 // pred_check_branch
      %2090 = sbr.rel (%p2088) target = $region61
    $region60: #{tpu_custom_call.1} parent=1 // pred_region
      %v2091 = vld [vmem:[#allocation2] sm:$0xff]
      %v2092 = vld [vmem:[#allocation2 + $0x8] sm:$0xff]
      %v2093 = vld [vmem:[#allocation2 + $0x10] sm:$0xff]
      %v2094 = vld [vmem:[#allocation2 + $0x18] sm:$0xff]
      %v2095 = vld [vmem:[#allocation2 + $0x20] sm:$0xff]
      %v2096 = vld [vmem:[#allocation2 + $0x28] sm:$0xff]
      %v2097 = vld [vmem:[#allocation2 + $0x30] sm:$0xff]
      %v2098 = vld [vmem:[#allocation2 + $0x38] sm:$0xff]
      %v2099 = vxor.u32 %v2091, 2147483648
      %v2100 = vxor.u32 %v2092, 2147483648
      %v2101 = vxor.u32 %v2093, 2147483648
      %v2102 = vxor.u32 %v2094, 2147483648
      %v2103 = vxor.u32 %v2095, 2147483648
      %v2104 = vxor.u32 %v2096, 2147483648
      %v2105 = vxor.u32 %v2097, 2147483648
      %v2106 = vxor.u32 %v2098, 2147483648
      %v2107 = vmul.f32 %v2099, 1.442695
      %v2108 = vpow.pop %v2107
      %v2109 = vmul.f32 %v2100, 1.442695
      %v2110 = vpow.pop %v2109
      %v2111 = vmul.f32 %v2101, 1.442695
      %v2112 = vpow.pop %v2111
      %v2113 = vmul.f32 %v2102, 1.442695
      %v2114 = vpow.pop %v2113
      %v2115 = vmul.f32 %v2103, 1.442695
      %v2116 = vpow.pop %v2115
      %v2117 = vmul.f32 %v2104, 1.442695
      %v2118 = vpow.pop %v2117
      %v2119 = vmul.f32 %v2105, 1.442695
      %v2120 = vpow.pop %v2119
      %v2121 = vmul.f32 %v2106, 1.442695
      %v2122 = vpow.pop %v2121
      %v2123 = vadd.f32 %v2108, 1.0
      %v2124 = vadd.f32 %v2110, 1.0
      %v2125 = vadd.f32 %v2112, 1.0
      %v2126 = vadd.f32 %v2114, 1.0
      %v2127 = vadd.f32 %v2116, 1.0
      %v2128 = vadd.f32 %v2118, 1.0
      %v2129 = vadd.f32 %v2120, 1.0
      %v2130 = vadd.f32 %v2122, 1.0
      %v2131 = vrcp.pop %v2123
      %v2132 = vmul.f32 1.0, %v2131
      %v2133 = vrcp.pop %v2124
      %v2134 = vmul.f32 1.0, %v2133
      %v2135 = vrcp.pop %v2125
      %v2136 = vmul.f32 1.0, %v2135
      %v2137 = vrcp.pop %v2126
      %v2138 = vmul.f32 1.0, %v2137
      %v2139 = vrcp.pop %v2127
      %v2140 = vmul.f32 1.0, %v2139
      %v2141 = vrcp.pop %v2128
      %v2142 = vmul.f32 1.0, %v2141
      %v2143 = vrcp.pop %v2129
      %v2144 = vmul.f32 1.0, %v2143
      %v2145 = vrcp.pop %v2130
      %v2146 = vmul.f32 1.0, %v2145
      %v2147 = vmul.f32 %v2091, %v2132
      %v2148 = vmul.f32 %v2092, %v2134
      %v2149 = vmul.f32 %v2093, %v2136
      %v2150 = vmul.f32 %v2094, %v2138
      %v2151 = vmul.f32 %v2095, %v2140
      %v2152 = vmul.f32 %v2096, %v2142
      %v2153 = vmul.f32 %v2097, %v2144
      %v2154 = vmul.f32 %v2098, %v2146
      %v2155 = vld [vmem:[#allocation3] sm:$0xff]
      %v2156 = vld [vmem:[#allocation3 + $0x8] sm:$0xff]
      %v2157 = vld [vmem:[#allocation3 + $0x10] sm:$0xff]
      %v2158 = vld [vmem:[#allocation3 + $0x18] sm:$0xff]
      %v2159 = vld [vmem:[#allocation3 + $0x20] sm:$0xff]
      %v2160 = vld [vmem:[#allocation3 + $0x28] sm:$0xff]
      %v2161 = vld [vmem:[#allocation3 + $0x30] sm:$0xff]
      %v2162 = vld [vmem:[#allocation3 + $0x38] sm:$0xff]
      %v2163 = vmul.f32 %v2147, %v2155
      %v2164 = vmul.f32 %v2148, %v2156
      %v2165 = vmul.f32 %v2149, %v2157
      %v2166 = vmul.f32 %v2150, %v2158
      %v2167 = vmul.f32 %v2151, %v2159
      %v2168 = vmul.f32 %v2152, %v2160
      %v2169 = vmul.f32 %v2153, %v2161
      %v2170 = vmul.f32 %v2154, %v2162
      %v2171 = vpack.c.bf16 %v2167, %v2163
      %v2172 = vpack.c.bf16 %v2168, %v2164
      %v2173 = vpack.c.bf16 %v2169, %v2165
      %v2174 = vpack.c.bf16 %v2170, %v2166
      %v2179 = vunpack.c.l.b16 %v2171
      %v2180 = vunpack.c.l.b16 %v2172
      %v2181 = vunpack.c.l.b16 %v2173
      %v2182 = vunpack.c.l.b16 %v2174
      %v2183 = vunpack.c.h.b16 %v2171
      %v2184 = vunpack.c.h.b16 %v2172
      %v2185 = vunpack.c.h.b16 %v2173
      %v2186 = vunpack.c.h.b16 %v2174
      %v2187 = vpack.c.b16 %v2180, %v2179
      %v2188 = vpack.c.b16 %v2182, %v2181
      %v2189 = vpack.c.b16 %v2184, %v2183
      %v2190 = vpack.c.b16 %v2186, %v2185
      %2195 = vst [vmem:[#allocation15] sm:$0xff] %v2187
      %2196 = vst [vmem:[#allocation15 + $0x8] sm:$0xff] %v2188
      %2197 = vst [vmem:[#allocation15 + $0x10] sm:$0xff] %v2189
      %2198 = vst [vmem:[#allocation15 + $0x18] sm:$0xff] %v2190
    $region61: #{tpu_custom_call.1} parent=1 // pred_fallthru
      _
    // Predicated region
    $region62: #{tpu_custom_call.1} parent=1 // pred_check
      _
    $region63: #{tpu_custom_call.1} parent=1 // pred_check_branch
      %2200 = sbr.rel (0) target = $region65
    $region64: #{tpu_custom_call.1} parent=1 // pred_region
      %s2202 = ssub.s32 512, 512
      %2203 = vsyncadd [#allocation6], %s2202
      %s2204 = sshll.u32 [#allocation15], 4
      %s2205 = int_to_ptr.vmem [resolvable:$true] %s2204
      %2210 = dma.vmem_to_hbm [thread:$0]  %s2205, 512, %s7, [#allocation6], 256, 256, 16
    $region65: #{tpu_custom_call.1} parent=1 // pred_fallthru
      _
    // Predicated region
    $region66: #{tpu_custom_call.1} parent=1 // pred_check
      _
    $region67: #{tpu_custom_call.1} parent=1 // pred_check_branch
      %2212 = sbr.rel (0) target = $region69
    $region68: #{tpu_custom_call.1} parent=1 // pred_region
      %2213 = dma.done [#allocation6], 512
    $region69: #{tpu_custom_call.1} parent=1 // pred_fallthru
      _
    %2214 = vsyncpa [#allocation5], 1
    %2215 = vsyncpa [#allocation8], 1
    %2216 = vsyncpa [#allocation11], 1
    %2217 = vsyncpa [#allocation14], 1
    %2218 = vsyncpa [#allocation6], 1

</llo_original>
